<compile_context>
chip_gen: v7x
topology: tpu7x:2x2x1
jax: 0.10.0
libtpu: 0.0.40
codegen_flags: <defaults>
</compile_context>

<pallas_src>
import functools

import jax
import jax.numpy as jnp
from jax.experimental import pallas as pl
from jax.experimental.pallas import tpu as pltpu

NUM_LAYERS = 5
LEAKY_SLOPE = 0.1
C_PAD = 128                                   # lane-padded channel width
W_ROWS = NUM_LAYERS * 2 * C_PAD               # weight rows in the slab (w0|w1 per layer)
SLAB_ROWS = ((W_ROWS + NUM_LAYERS + 7) // 8) * 8   # + one bias row per layer, 8-row aligned


def _force_encoder_kernel(x_ref, p_ref, o_ref, *, num_layers, seq_len, compute_dtype):
    """Whole ForceEncoder forward for the whole batch, fully in VMEM."""
    M, c_pad = x_ref.shape
    w_rows = num_layers * 2 * c_pad

    # Per-row sequence position inside its batch element, broadcast ONCE to full lane width
    # (JAX does not CSE broadcast_in_dim, so do not rebuild this inside the layer loop).
    pos = jax.lax.broadcasted_iota(jnp.int32, (M, c_pad), 0) % seq_len

    # All bias rows in one (8, 128) tile load (rows w_rows .. w_rows+7 exist and are 0-padded).
    bias_tile = p_ref[pl.ds(w_rows, 8), :].astype(jnp.float32)           # (8, 128)

    x = x_ref[...]                                                       # (B*L, 128) f32
    for li in range(num_layers):
        shift = 1 << li
        base = li * 2 * c_pad
        w0 = p_ref[pl.ds(base, c_pad), :].astype(compute_dtype)          # (128, 128) tap t-1
        w1 = p_ref[pl.ds(base + c_pad, c_pad), :].astype(compute_dtype)  # (128, 128) tap t
        bias = bias_tile[li:li + 1, :]                                   # (1, 128)

        # x_prev[r] = x[r - shift] within the same batch element, else 0 (causal left pad).
        # pltpu.roll wraps circularly, but every wrapped row has pos < shift -> masked to 0.
        x_shift = pltpu.roll(x, shift=shift, axis=0)
        x_prev = jnp.where(pos >= shift, x_shift, 0.0)

        # Two K=128 MXU matmuls (no (M, 256) concat temporary); accumulate in f32.
        y = (jnp.dot(x_prev.astype(compute_dtype), w0, preferred_element_type=jnp.float32)
             + jnp.dot(x.astype(compute_dtype), w1, preferred_element_type=jnp.float32)
             + bias)
        x = jnp.where(y > 0, y, LEAKY_SLOPE * y)                         # LeakyReLU(0.1)

    # Valid stride-2**num_layers outputs live at rows r % 2**num_layers == 0: decimate once.
    dec = 1 << num_layers
    out = x.reshape(M // dec, dec, c_pad)[:, 0, :]                       # (B*L_out, 128)
    o_ref[...] = out.astype(o_ref.dtype)


def pack_force_encoder_params(weights, biases, dtype=jnp.bfloat16):
    """Pack (w0, w1, bias) of all layers into one lane-dense (SLAB_ROWS, 128) slab.

    Stored in bfloat16 by default to halve the (mostly-zero-padded) weight DMA; the kernel
    casts to its compute dtype and accumulates in float32.
    """
    assert len(weights) == NUM_LAYERS and len(biases) == NUM_LAYERS
    slab = jnp.zeros((SLAB_ROWS, C_PAD), dtype)
    for li, (w, b) in enumerate(zip(weights, biases)):
        c_out, c_in, k = w.shape
        assert k == 2 and c_in <= C_PAD and c_out <= C_PAD
        base = li * 2 * C_PAD
        w0 = jnp.transpose(w[:, :, 0]).astype(dtype)   # (c_in, c_out): tap at t-1
        w1 = jnp.transpose(w[:, :, 1]).astype(dtype)   # (c_in, c_out): tap at t
        slab = slab.at[base:base + c_in, :c_out].set(w0)
        slab = slab.at[base + C_PAD:base + C_PAD + c_in, :c_out].set(w1)
        slab = slab.at[W_ROWS + li, :c_out].set(b.astype(dtype))
    return slab


@functools.partial(jax.jit, static_argnames=("c_final", "compute_dtype"))
def force_encoder_pallas(force_ncw, param_slab, *, c_final, compute_dtype=jnp.float32):
    """force_ncw: (B, C_in, L) float32, PyTorch NCW. Returns (B, c_final, L // 2**5).

    Fully jitted: layout plumbing (transpose/pad/slice) fuses around the single pallas_call.
    """
    B, c_in0, L = force_ncw.shape
    assert c_in0 <= C_PAD and L % (1 << NUM_LAYERS) == 0
    L_out = L >> NUM_LAYERS
    M = B * L
    assert M % 8 == 0, "B*L must be sublane-aligned"

    # NCW -> (B*L, C) with channels zero-padded to a lane-dense 128 width.
    x = jnp.transpose(force_ncw, (0, 2, 1)).reshape(M, c_in0).astype(jnp.float32)
    x = jnp.pad(x, ((0, 0), (0, C_PAD - c_in0)))

    kernel = functools.partial(_force_encoder_kernel, num_layers=NUM_LAYERS,
                               seq_len=L, compute_dtype=compute_dtype)
    out = pl.pallas_call(
        kernel,
        out_shape=jax.ShapeDtypeStruct((B * L_out, C_PAD), jnp.float32),
        grid=(1,),
        in_specs=[pl.BlockSpec((M, C_PAD), lambda i: (0, 0)),
                  pl.BlockSpec((SLAB_ROWS, C_PAD), lambda i: (0, 0))],
        out_specs=pl.BlockSpec((B * L_out, C_PAD), lambda i: (0, 0)),
        compiler_params=pltpu.CompilerParams(dimension_semantics=("arbitrary",)),
    )(x, param_slab)

    # Strip lane padding, back to PyTorch NCW layout: (B, c_final, L_out).
    out = out[:, :c_final].reshape(B, L_out, c_final)
    return jnp.transpose(out, (0, 2, 1))


def force_encoder_reference(force_ncw, weights, biases):
    """Pure-JAX reference using lax.conv, mirroring CausalConv1D + LeakyReLU."""
    x = force_ncw.astype(jnp.float32)
    for w, b in zip(weights, biases):
        y = jax.lax.conv_general_dilated(
            x, w.astype(jnp.float32),
            window_strides=(2,), padding=((1, 1),),
            dimension_numbers=("NCH", "OIH", "NCH"),
        )
        y = y + b.astype(jnp.float32)[None, :, None]
        y = y[:, :, :-1]                       # causal chop of trailing pad output
        x = jnp.where(y > 0, y, LEAKY_SLOPE * y)
    return x


if __name__ == "__main__":
    key = jax.random.PRNGKey(0)
    z_dim = 32
    B, L = 2, 32
    chans = [6, 16, 32, 64, 128, 2 * z_dim]

    keys = jax.random.split(key, 2 * NUM_LAYERS + 1)
    weights, biases = [], []
    for i in range(NUM_LAYERS):
        c_in, c_out = chans[i], chans[i + 1]
        scale = (2.0 / (c_in * 2)) ** 0.5      # kaiming-ish deterministic init
        weights.append(scale * jax.random.normal(keys[2 * i], (c_out, c_in, 2), jnp.float32))
        biases.append(0.01 * jax.random.normal(keys[2 * i + 1], (c_out,), jnp.float32))

    force = jax.random.normal(keys[-1], (B, 6, L), jnp.float32)   # PyTorch NCW input

    # One-time host-side packing; slab is bf16 (halves the dominant HBM DMA).
    param_slab = pack_force_encoder_params(weights, biases, dtype=jnp.bfloat16)

    # compute_dtype=float32 keeps matmul operands f32 (safest on v5e; set bfloat16 on v6e/v7x).
    out = force_encoder_pallas(force, param_slab, c_final=chans[-1],
                               compute_dtype=jnp.float32)
    out = jax.block_until_ready(out)
    assert out.shape == (B, 2 * z_dim, L // 2 ** NUM_LAYERS), out.shape

    # (1) Kernel-correctness check: compare against a reference that uses exactly the
    #     bf16-quantized parameters the kernel consumes (isolates kernel bugs).
    wq = [w.astype(jnp.bfloat16).astype(jnp.float32) for w in weights]
    bq = [b.astype(jnp.bfloat16).astype(jnp.float32) for b in biases]
    ref_q = force_encoder_reference(force, wq, bq)
    if not jnp.allclose(out, ref_q, atol=1e-2, rtol=1e-2):
        err = float(jnp.max(jnp.abs(out - ref_q)))
        raise AssertionError(f"Pallas ForceEncoder mismatch vs quantized-weight reference "
                             f"(max abs err {err})")

    # (2) Quantization sanity vs the original float32 module parameters (looser tolerance
    #     only accounts for the deliberate bf16 weight storage).
    ref = force_encoder_reference(force, weights, biases)
    if not jnp.allclose(out, ref, atol=3e-2, rtol=3e-2):
        err = float(jnp.max(jnp.abs(out - ref)))
        raise AssertionError(f"Pallas ForceEncoder output mismatch vs f32 reference "
                             f"(max abs err {err})")

    print("KERNEL_OK")
</pallas_src>

<mosaic_0001>
module attributes {stable_mosaic.version = 11 : i64} {
  func.func @_force_encoder_kernel(%arg0: i32, %arg1: memref<64x128xf32, #tpu.memory_space<vmem>>, %arg2: memref<1288x128xbf16, #tpu.memory_space<vmem>>, %arg3: memref<2x128xf32, #tpu.memory_space<vmem>>) attributes {dimension_semantics = [#tpu.dimension_semantics<arbitrary>], iteration_bounds = array<i64: 1>, scalar_prefetch = 0 : i64, scratch_operands = 0 : i64, tpu.core_type = #tpu.core_type<tc>, window_params = [{pipeline_mode = #tpu.pipeline_mode<synchronous>, transform_indices = @transform_0, window_bounds = array<i64: 64, 128>}, {pipeline_mode = #tpu.pipeline_mode<synchronous>, transform_indices = @transform_1, window_bounds = array<i64: 1288, 128>}, {pipeline_mode = #tpu.pipeline_mode<synchronous>, transform_indices = @transform_2, window_bounds = array<i64: 2, 128>}]} {
    %0 = tpu.iota {dimensions = array<i32: 0>} : vector<64x128xi32>
    %c32_i32 = arith.constant 32 : i32
    %c0_i32 = arith.constant 0 : i32
    %1 = arith.cmpi eq, %c32_i32, %c0_i32 : i32
    %c1_i32 = arith.constant 1 : i32
    %2 = arith.select %1, %c1_i32, %c32_i32 : i32
    %3 = vector.broadcast %2 : i32 to vector<64x128xi32>
    %4 = arith.remsi %0, %3 : vector<64x128xi32>
    %c0_i32_0 = arith.constant 0 : i32
    %5 = vector.broadcast %c0_i32_0 : i32 to vector<64x128xi32>
    %6 = arith.cmpi ne, %4, %5 : vector<64x128xi32>
    %c0_i32_1 = arith.constant 0 : i32
    %7 = vector.broadcast %c0_i32_1 : i32 to vector<64x128xi32>
    %8 = arith.cmpi slt, %4, %7 : vector<64x128xi32>
    %c0_i32_2 = arith.constant 0 : i32
    %9 = arith.cmpi slt, %2, %c0_i32_2 : i32
    %10 = vector.broadcast %9 : i1 to vector<64x128xi1>
    %11 = vector.broadcast %10 : vector<64x128xi1> to vector<64x128xi1>
    %12 = arith.xori %8, %11 : vector<64x128xi1>
    %13 = arith.andi %12, %6 : vector<64x128xi1>
    %14 = vector.broadcast %2 : i32 to vector<64x128xi32>
    %15 = arith.addi %4, %14 : vector<64x128xi32>
    %16 = arith.select %13, %15, %4 : vector<64x128xi1>, vector<64x128xi32>
    %c1280 = arith.constant 1280 : index
    %c0 = arith.constant 0 : index
    %17 = vector.load %arg2[%c1280, %c0] : memref<1288x128xbf16, #tpu.memory_space<vmem>>, vector<8x128xbf16>
    %18 = arith.extf %17 : vector<8x128xbf16> to vector<8x128xf32>
    %c0_3 = arith.constant 0 : index
    %c0_4 = arith.constant 0 : index
    %19 = vector.load %arg1[%c0_3, %c0_4] : memref<64x128xf32, #tpu.memory_space<vmem>>, vector<64x128xf32>
    %c0_5 = arith.constant 0 : index
    %c0_6 = arith.constant 0 : index
    %20 = vector.load %arg2[%c0_5, %c0_6] : memref<1288x128xbf16, #tpu.memory_space<vmem>>, vector<128x128xbf16>
    %21 = arith.extf %20 : vector<128x128xbf16> to vector<128x128xf32>
    %c128 = arith.constant 128 : index
    %c0_7 = arith.constant 0 : index
    %22 = vector.load %arg2[%c128, %c0_7] : memref<1288x128xbf16, #tpu.memory_space<vmem>>, vector<128x128xbf16>
    %23 = arith.extf %22 : vector<128x128xbf16> to vector<128x128xf32>
    %24 = vector.extract_strided_slice %18 {offsets = [0, 0], sizes = [1, 128], strides = [1, 1]} : vector<8x128xf32> to vector<1x128xf32>
    %c1_i32_8 = arith.constant 1 : i32
    %25 = tpu.dynamic_rotate %19 by %c1_i32_8 dim 0 : vector<64x128xf32>, i32 -> vector<64x128xf32>
    %c1_i32_9 = arith.constant 1 : i32
    %26 = vector.broadcast %c1_i32_9 : i32 to vector<64x128xi32>
    %27 = arith.cmpi sge, %16, %26 : vector<64x128xi32>
    %cst = arith.constant 0.000000e+00 : f32
    %28 = vector.broadcast %cst : f32 to vector<64x128xf32>
    %29 = arith.select %27, %25, %28 : vector<64x128xi1>, vector<64x128xf32>
    %cst_10 = arith.constant dense<0.000000e+00> : vector<64x128xf32>
    %30 = tpu.matmul %29, %21, %cst_10 {dimension_numbers = #tpu.dot_dimension_numbers<[1], [0], [0], [1], [0, 0, 1, 1], [], []>} : vector<64x128xf32>, vector<128x128xf32>, vector<64x128xf32> -> vector<64x128xf32>
    %cst_11 = arith.constant dense<0.000000e+00> : vector<64x128xf32>
    %31 = tpu.matmul %19, %23, %cst_11 {dimension_numbers = #tpu.dot_dimension_numbers<[1], [0], [0], [1], [0, 0, 1, 1], [], []>} : vector<64x128xf32>, vector<128x128xf32>, vector<64x128xf32> -> vector<64x128xf32>
    %32 = arith.addf %30, %31 : vector<64x128xf32>
    %33 = vector.broadcast %24 : vector<1x128xf32> to vector<64x128xf32>
    %34 = arith.addf %32, %33 : vector<64x128xf32>
    %cst_12 = arith.constant 0.000000e+00 : f32
    %35 = vector.broadcast %cst_12 : f32 to vector<64x128xf32>
    %36 = arith.cmpf ogt, %34, %35 : vector<64x128xf32>
    %cst_13 = arith.constant 1.000000e-01 : f32
    %37 = vector.broadcast %cst_13 : f32 to vector<64x128xf32>
    %38 = arith.mulf %37, %34 : vector<64x128xf32>
    %39 = arith.select %36, %34, %38 : vector<64x128xi1>, vector<64x128xf32>
    %c256 = arith.constant 256 : index
    %c0_14 = arith.constant 0 : index
    %40 = vector.load %arg2[%c256, %c0_14] : memref<1288x128xbf16, #tpu.memory_space<vmem>>, vector<128x128xbf16>
    %41 = arith.extf %40 : vector<128x128xbf16> to vector<128x128xf32>
    %c384 = arith.constant 384 : index
    %c0_15 = arith.constant 0 : index
    %42 = vector.load %arg2[%c384, %c0_15] : memref<1288x128xbf16, #tpu.memory_space<vmem>>, vector<128x128xbf16>
    %43 = arith.extf %42 : vector<128x128xbf16> to vector<128x128xf32>
    %44 = vector.extract_strided_slice %18 {offsets = [1, 0], sizes = [1, 128], strides = [1, 1]} : vector<8x128xf32> to vector<1x128xf32>
    %c2_i32 = arith.constant 2 : i32
    %45 = tpu.dynamic_rotate %39 by %c2_i32 dim 0 : vector<64x128xf32>, i32 -> vector<64x128xf32>
    %c2_i32_16 = arith.constant 2 : i32
    %46 = vector.broadcast %c2_i32_16 : i32 to vector<64x128xi32>
    %47 = arith.cmpi sge, %16, %46 : vector<64x128xi32>
    %cst_17 = arith.constant 0.000000e+00 : f32
    %48 = vector.broadcast %cst_17 : f32 to vector<64x128xf32>
    %49 = arith.select %47, %45, %48 : vector<64x128xi1>, vector<64x128xf32>
    %cst_18 = arith.constant dense<0.000000e+00> : vector<64x128xf32>
    %50 = tpu.matmul %49, %41, %cst_18 {dimension_numbers = #tpu.dot_dimension_numbers<[1], [0], [0], [1], [0, 0, 1, 1], [], []>} : vector<64x128xf32>, vector<128x128xf32>, vector<64x128xf32> -> vector<64x128xf32>
    %cst_19 = arith.constant dense<0.000000e+00> : vector<64x128xf32>
    %51 = tpu.matmul %39, %43, %cst_19 {dimension_numbers = #tpu.dot_dimension_numbers<[1], [0], [0], [1], [0, 0, 1, 1], [], []>} : vector<64x128xf32>, vector<128x128xf32>, vector<64x128xf32> -> vector<64x128xf32>
    %52 = arith.addf %50, %51 : vector<64x128xf32>
    %53 = vector.broadcast %44 : vector<1x128xf32> to vector<64x128xf32>
    %54 = arith.addf %52, %53 : vector<64x128xf32>
    %cst_20 = arith.constant 0.000000e+00 : f32
    %55 = vector.broadcast %cst_20 : f32 to vector<64x128xf32>
    %56 = arith.cmpf ogt, %54, %55 : vector<64x128xf32>
    %cst_21 = arith.constant 1.000000e-01 : f32
    %57 = vector.broadcast %cst_21 : f32 to vector<64x128xf32>
    %58 = arith.mulf %57, %54 : vector<64x128xf32>
    %59 = arith.select %56, %54, %58 : vector<64x128xi1>, vector<64x128xf32>
    %c512 = arith.constant 512 : index
    %c0_22 = arith.constant 0 : index
    %60 = vector.load %arg2[%c512, %c0_22] : memref<1288x128xbf16, #tpu.memory_space<vmem>>, vector<128x128xbf16>
    %61 = arith.extf %60 : vector<128x128xbf16> to vector<128x128xf32>
    %c640 = arith.constant 640 : index
    %c0_23 = arith.constant 0 : index
    %62 = vector.load %arg2[%c640, %c0_23] : memref<1288x128xbf16, #tpu.memory_space<vmem>>, vector<128x128xbf16>
    %63 = arith.extf %62 : vector<128x128xbf16> to vector<128x128xf32>
    %64 = vector.extract_strided_slice %18 {offsets = [2, 0], sizes = [1, 128], strides = [1, 1]} : vector<8x128xf32> to vector<1x128xf32>
    %c4_i32 = arith.constant 4 : i32
    %65 = tpu.dynamic_rotate %59 by %c4_i32 dim 0 : vector<64x128xf32>, i32 -> vector<64x128xf32>
    %c4_i32_24 = arith.constant 4 : i32
    %66 = vector.broadcast %c4_i32_24 : i32 to vector<64x128xi32>
    %67 = arith.cmpi sge, %16, %66 : vector<64x128xi32>
    %cst_25 = arith.constant 0.000000e+00 : f32
    %68 = vector.broadcast %cst_25 : f32 to vector<64x128xf32>
    %69 = arith.select %67, %65, %68 : vector<64x128xi1>, vector<64x128xf32>
    %cst_26 = arith.constant dense<0.000000e+00> : vector<64x128xf32>
    %70 = tpu.matmul %69, %61, %cst_26 {dimension_numbers = #tpu.dot_dimension_numbers<[1], [0], [0], [1], [0, 0, 1, 1], [], []>} : vector<64x128xf32>, vector<128x128xf32>, vector<64x128xf32> -> vector<64x128xf32>
    %cst_27 = arith.constant dense<0.000000e+00> : vector<64x128xf32>
    %71 = tpu.matmul %59, %63, %cst_27 {dimension_numbers = #tpu.dot_dimension_numbers<[1], [0], [0], [1], [0, 0, 1, 1], [], []>} : vector<64x128xf32>, vector<128x128xf32>, vector<64x128xf32> -> vector<64x128xf32>
    %72 = arith.addf %70, %71 : vector<64x128xf32>
    %73 = vector.broadcast %64 : vector<1x128xf32> to vector<64x128xf32>
    %74 = arith.addf %72, %73 : vector<64x128xf32>
    %cst_28 = arith.constant 0.000000e+00 : f32
    %75 = vector.broadcast %cst_28 : f32 to vector<64x128xf32>
    %76 = arith.cmpf ogt, %74, %75 : vector<64x128xf32>
    %cst_29 = arith.constant 1.000000e-01 : f32
    %77 = vector.broadcast %cst_29 : f32 to vector<64x128xf32>
    %78 = arith.mulf %77, %74 : vector<64x128xf32>
    %79 = arith.select %76, %74, %78 : vector<64x128xi1>, vector<64x128xf32>
    %c768 = arith.constant 768 : index
    %c0_30 = arith.constant 0 : index
    %80 = vector.load %arg2[%c768, %c0_30] : memref<1288x128xbf16, #tpu.memory_space<vmem>>, vector<128x128xbf16>
    %81 = arith.extf %80 : vector<128x128xbf16> to vector<128x128xf32>
    %c896 = arith.constant 896 : index
    %c0_31 = arith.constant 0 : index
    %82 = vector.load %arg2[%c896, %c0_31] : memref<1288x128xbf16, #tpu.memory_space<vmem>>, vector<128x128xbf16>
    %83 = arith.extf %82 : vector<128x128xbf16> to vector<128x128xf32>
    %84 = vector.extract_strided_slice %18 {offsets = [3, 0], sizes = [1, 128], strides = [1, 1]} : vector<8x128xf32> to vector<1x128xf32>
    %c8_i32 = arith.constant 8 : i32
    %85 = tpu.dynamic_rotate %79 by %c8_i32 dim 0 : vector<64x128xf32>, i32 -> vector<64x128xf32>
    %c8_i32_32 = arith.constant 8 : i32
    %86 = vector.broadcast %c8_i32_32 : i32 to vector<64x128xi32>
    %87 = arith.cmpi sge, %16, %86 : vector<64x128xi32>
    %cst_33 = arith.constant 0.000000e+00 : f32
    %88 = vector.broadcast %cst_33 : f32 to vector<64x128xf32>
    %89 = arith.select %87, %85, %88 : vector<64x128xi1>, vector<64x128xf32>
    %cst_34 = arith.constant dense<0.000000e+00> : vector<64x128xf32>
    %90 = tpu.matmul %89, %81, %cst_34 {dimension_numbers = #tpu.dot_dimension_numbers<[1], [0], [0], [1], [0, 0, 1, 1], [], []>} : vector<64x128xf32>, vector<128x128xf32>, vector<64x128xf32> -> vector<64x128xf32>
    %cst_35 = arith.constant dense<0.000000e+00> : vector<64x128xf32>
    %91 = tpu.matmul %79, %83, %cst_35 {dimension_numbers = #tpu.dot_dimension_numbers<[1], [0], [0], [1], [0, 0, 1, 1], [], []>} : vector<64x128xf32>, vector<128x128xf32>, vector<64x128xf32> -> vector<64x128xf32>
    %92 = arith.addf %90, %91 : vector<64x128xf32>
    %93 = vector.broadcast %84 : vector<1x128xf32> to vector<64x128xf32>
    %94 = arith.addf %92, %93 : vector<64x128xf32>
    %cst_36 = arith.constant 0.000000e+00 : f32
    %95 = vector.broadcast %cst_36 : f32 to vector<64x128xf32>
    %96 = arith.cmpf ogt, %94, %95 : vector<64x128xf32>
    %cst_37 = arith.constant 1.000000e-01 : f32
    %97 = vector.broadcast %cst_37 : f32 to vector<64x128xf32>
    %98 = arith.mulf %97, %94 : vector<64x128xf32>
    %99 = arith.select %96, %94, %98 : vector<64x128xi1>, vector<64x128xf32>
    %c1024 = arith.constant 1024 : index
    %c0_38 = arith.constant 0 : index
    %100 = vector.load %arg2[%c1024, %c0_38] : memref<1288x128xbf16, #tpu.memory_space<vmem>>, vector<128x128xbf16>
    %101 = arith.extf %100 : vector<128x128xbf16> to vector<128x128xf32>
    %c1152 = arith.constant 1152 : index
    %c0_39 = arith.constant 0 : index
    %102 = vector.load %arg2[%c1152, %c0_39] : memref<1288x128xbf16, #tpu.memory_space<vmem>>, vector<128x128xbf16>
    %103 = arith.extf %102 : vector<128x128xbf16> to vector<128x128xf32>
    %104 = vector.extract_strided_slice %18 {offsets = [4, 0], sizes = [1, 128], strides = [1, 1]} : vector<8x128xf32> to vector<1x128xf32>
    %c16_i32 = arith.constant 16 : i32
    %105 = tpu.dynamic_rotate %99 by %c16_i32 dim 0 : vector<64x128xf32>, i32 -> vector<64x128xf32>
    %c16_i32_40 = arith.constant 16 : i32
    %106 = vector.broadcast %c16_i32_40 : i32 to vector<64x128xi32>
    %107 = arith.cmpi sge, %16, %106 : vector<64x128xi32>
    %cst_41 = arith.constant 0.000000e+00 : f32
    %108 = vector.broadcast %cst_41 : f32 to vector<64x128xf32>
    %109 = arith.select %107, %105, %108 : vector<64x128xi1>, vector<64x128xf32>
    %cst_42 = arith.constant dense<0.000000e+00> : vector<64x128xf32>
    %110 = tpu.matmul %109, %101, %cst_42 {dimension_numbers = #tpu.dot_dimension_numbers<[1], [0], [0], [1], [0, 0, 1, 1], [], []>} : vector<64x128xf32>, vector<128x128xf32>, vector<64x128xf32> -> vector<64x128xf32>
    %cst_43 = arith.constant dense<0.000000e+00> : vector<64x128xf32>
    %111 = tpu.matmul %99, %103, %cst_43 {dimension_numbers = #tpu.dot_dimension_numbers<[1], [0], [0], [1], [0, 0, 1, 1], [], []>} : vector<64x128xf32>, vector<128x128xf32>, vector<64x128xf32> -> vector<64x128xf32>
    %112 = arith.addf %110, %111 : vector<64x128xf32>
    %113 = vector.broadcast %104 : vector<1x128xf32> to vector<64x128xf32>
    %114 = arith.addf %112, %113 : vector<64x128xf32>
    %cst_44 = arith.constant 0.000000e+00 : f32
    %115 = vector.broadcast %cst_44 : f32 to vector<64x128xf32>
    %116 = arith.cmpf ogt, %114, %115 : vector<64x128xf32>
    %cst_45 = arith.constant 1.000000e-01 : f32
    %117 = vector.broadcast %cst_45 : f32 to vector<64x128xf32>
    %118 = arith.mulf %117, %114 : vector<64x128xf32>
    %119 = arith.select %116, %114, %118 : vector<64x128xi1>, vector<64x128xf32>
    %120 = vector.shape_cast %119 : vector<64x128xf32> to vector<2x32x128xf32>
    %121 = vector.extract_strided_slice %120 {offsets = [0, 0, 0], sizes = [2, 1, 128], strides = [1, 1, 1]} : vector<2x32x128xf32> to vector<2x1x128xf32>
    %122 = vector.shape_cast %121 : vector<2x1x128xf32> to vector<2x128xf32>
    %c0_46 = arith.constant 0 : index
    %c0_47 = arith.constant 0 : index
    %123 = vector.load %arg3[%c0_46, %c0_47] : memref<2x128xf32, #tpu.memory_space<vmem>>, vector<2x128xf32>
    tpu.vector_store %arg3[%c0_46, %c0_47], %122 {strides = array<i32>} : memref<2x128xf32, #tpu.memory_space<vmem>>, vector<2x128xf32>,
    return
  }
  func.func @transform_0(%arg0: i32) -> (i32, i32) {
    %c0_i32 = arith.constant 0 : i32
    %c0_i32_0 = arith.constant 0 : i32
    %c0_i32_1 = arith.constant 0 : i32
    return %c0_i32, %c0_i32_0 : i32, i32
  }
  func.func @transform_1(%arg0: i32) -> (i32, i32) {
    %c0_i32 = arith.constant 0 : i32
    %c0_i32_0 = arith.constant 0 : i32
    %c0_i32_1 = arith.constant 0 : i32
    return %c0_i32, %c0_i32_0 : i32, i32
  }
  func.func @transform_2(%arg0: i32) -> (i32, i32) {
    %c0_i32 = arith.constant 0 : i32
    %c0_i32_0 = arith.constant 0 : i32
    %c0_i32_1 = arith.constant 0 : i32
    return %c0_i32, %c0_i32_0 : i32, i32
  }
}

</mosaic_0001>

<llo_original>
// kernel: force_encoder_pallas.1
$region0: #{force_encoder_pallas.1}
  #allocation0 [shape = 'u32[]', space=smem, size = 0x4, offset = 0x4, fixed_abs, tag = 'smem constant byte address 0x4 - core index']
  #allocation1 [shape = 'u32[144,128]{1,0:T(1,128)}', space=vmem, size = 0x12000, scoped, tag = 'internal scratch']
  %s0 = inlined_call_operand.vmem [shape: f32[64,128], index: 0, kind: input, shape index: {}]
  %s1 = inlined_call_operand.hbm [shape: bf16[1288,128], index: 1, kind: input, shape index: {}]
  %s2 = inlined_call_operand.hbm [shape: f32[2,128], index: 2, kind: output, shape index: {}]
  %s3 = sld [smem:[#allocation0]]
  $region22: #{force_encoder_pallas.1} parent=0
    _
  %s5 = ssub.s32 1, %s3
  %s6 = scalar_select 0, %s5, %s3
  $region1: #{force_encoder_pallas.1} parent=0
    #allocation2 [shape = 'u8[329728]{0}', space=vmem, size = 0x50800, scoped, tag = 'input window, operand 1, single buffered']
    #allocation3 [shape = 's32[1]{0}', space=sflag, size = 0x4, scoped, tag = 'scoped memory for force_encoder_pallas.1']
    #allocation4 [shape = 's32[1]{0}', space=sflag, size = 0x4, scoped, tag = 'scoped memory for force_encoder_pallas.1']
    #allocation5 [shape = 'u8[1024]{0}', space=vmem, size = 0x400, scoped, tag = 'output window, operand 0, single buffered']
    %7 = vsyncpa [#allocation3], 0
    %8 = vsyncpa [#allocation4], 0
    // Predicated region
    $region2: #{force_encoder_pallas.1} parent=1 // pred_check
      _
    $region3: #{force_encoder_pallas.1} parent=1 // pred_check_branch
      %10 = sbr.rel (0) target = $region5
    $region4: #{force_encoder_pallas.1} parent=1 // pred_region
      _
    $region5: #{force_encoder_pallas.1} parent=1 // pred_fallthru
      _
    // Predicated region
    $region6: #{force_encoder_pallas.1} parent=1 // pred_check
      _
    $region7: #{force_encoder_pallas.1} parent=1 // pred_check_branch
      %12 = sbr.rel (0) target = $region9
    $region8: #{force_encoder_pallas.1} parent=1 // pred_region
      %s14 = ssub.s32 10304, 10304
      %15 = vsyncadd [#allocation3], %s14
      %s16 = sshll.u32 [#allocation2], 4
      %s17 = int_to_ptr.vmem [resolvable:$true] %s16
      %22 = dma.hbm_to_vmem [thread:$0]  %s1, 10304, %s17, [#allocation3], 64, 64, 4
    $region9: #{force_encoder_pallas.1} parent=1 // pred_fallthru
      _
    // Predicated region
    $region10: #{force_encoder_pallas.1} parent=1 // pred_check
      _
    $region11: #{force_encoder_pallas.1} parent=1 // pred_check_branch
      %24 = sbr.rel (0) target = $region13
    $region12: #{force_encoder_pallas.1} parent=1 // pred_region
      %25 = dma.done [#allocation3], 10304
    $region13: #{force_encoder_pallas.1} parent=1 // pred_fallthru
      _
    %v26 = vlaneseq
    %v27 = vshrl.u32 %v26, 7
    %v28 = vadd.s32 %v27, 8
    %v29 = vadd.s32 %v27, 16
    %v30 = vadd.s32 %v27, 24
    %v31 = vadd.s32 %v27, 32
    %v32 = vadd.s32 %v27, 40
    %v33 = vadd.s32 %v27, 48
    %v34 = vadd.s32 %v27, 56
    %vm35 = vcmp.lt.s32.totalorder %v27, 0
    %v36 = vsub.s32 0, %v27
    %v37 = vsel %vm35, %v36, %v27
    %v38 = vshrl.u32 %v37, 5
    %v39 = vand.u32 %v37, 31
    %v40 = vsub.s32 0, %v39
    %v41 = vsel %vm35, %v40, %v39
    %vm42 = vcmp.lt.s32.totalorder %v28, 0
    %v43 = vsub.s32 0, %v28
    %v44 = vsel %vm42, %v43, %v28
    %v45 = vshrl.u32 %v44, 5
    %v46 = vand.u32 %v44, 31
    %v47 = vsub.s32 0, %v46
    %v48 = vsel %vm42, %v47, %v46
    %vm49 = vcmp.lt.s32.totalorder %v29, 0
    %v50 = vsub.s32 0, %v29
    %v51 = vsel %vm49, %v50, %v29
    %v52 = vshrl.u32 %v51, 5
    %v53 = vand.u32 %v51, 31
    %v54 = vsub.s32 0, %v53
    %v55 = vsel %vm49, %v54, %v53
    %vm56 = vcmp.lt.s32.totalorder %v30, 0
    %v57 = vsub.s32 0, %v30
    %v58 = vsel %vm56, %v57, %v30
    %v59 = vshrl.u32 %v58, 5
    %v60 = vand.u32 %v58, 31
    %v61 = vsub.s32 0, %v60
    %v62 = vsel %vm56, %v61, %v60
    %vm63 = vcmp.lt.s32.totalorder %v31, 0
    %v64 = vsub.s32 0, %v31
    %v65 = vsel %vm63, %v64, %v31
    %v66 = vshrl.u32 %v65, 5
    %v67 = vand.u32 %v65, 31
    %v68 = vsub.s32 0, %v67
    %v69 = vsel %vm63, %v68, %v67
    %vm70 = vcmp.lt.s32.totalorder %v32, 0
    %v71 = vsub.s32 0, %v32
    %v72 = vsel %vm70, %v71, %v32
    %v73 = vshrl.u32 %v72, 5
    %v74 = vand.u32 %v72, 31
    %v75 = vsub.s32 0, %v74
    %v76 = vsel %vm70, %v75, %v74
    %vm77 = vcmp.lt.s32.totalorder %v33, 0
    %v78 = vsub.s32 0, %v33
    %v79 = vsel %vm77, %v78, %v33
    %v80 = vshrl.u32 %v79, 5
    %v81 = vand.u32 %v79, 31
    %v82 = vsub.s32 0, %v81
    %v83 = vsel %vm77, %v82, %v81
    %vm84 = vcmp.lt.s32.totalorder %v34, 0
    %v85 = vsub.s32 0, %v34
    %v86 = vsel %vm84, %v85, %v34
    %v87 = vshrl.u32 %v86, 5
    %v88 = vand.u32 %v86, 31
    %v89 = vsub.s32 0, %v88
    %v90 = vsel %vm84, %v89, %v88
    %vm91 = vcmp.ne.s32.totalorder %v41, 0
    %vm92 = vcmp.ne.s32.totalorder %v48, 0
    %vm93 = vcmp.ne.s32.totalorder %v55, 0
    %vm94 = vcmp.ne.s32.totalorder %v62, 0
    %vm95 = vcmp.ne.s32.totalorder %v69, 0
    %vm96 = vcmp.ne.s32.totalorder %v76, 0
    %vm97 = vcmp.ne.s32.totalorder %v83, 0
    %vm98 = vcmp.ne.s32.totalorder %v90, 0
    %vm99 = vcmp.lt.s32.totalorder %v41, 0
    %vm100 = vcmp.lt.s32.totalorder %v48, 0
    %vm101 = vcmp.lt.s32.totalorder %v55, 0
    %vm102 = vcmp.lt.s32.totalorder %v62, 0
    %vm103 = vcmp.lt.s32.totalorder %v69, 0
    %vm104 = vcmp.lt.s32.totalorder %v76, 0
    %vm105 = vcmp.lt.s32.totalorder %v83, 0
    %vm106 = vcmp.lt.s32.totalorder %v90, 0
    %vm107 = vmand %vm99, %vm91
    %vm108 = vmand %vm100, %vm92
    %vm109 = vmand %vm101, %vm93
    %vm110 = vmand %vm102, %vm94
    %vm111 = vmand %vm103, %vm95
    %vm112 = vmand %vm104, %vm96
    %vm113 = vmand %vm105, %vm97
    %vm114 = vmand %vm106, %vm98
    %v115 = vadd.s32 %v41, 32
    %v116 = vadd.s32 %v48, 32
    %v117 = vadd.s32 %v55, 32
    %v118 = vadd.s32 %v62, 32
    %v119 = vadd.s32 %v69, 32
    %v120 = vadd.s32 %v76, 32
    %v121 = vadd.s32 %v83, 32
    %v122 = vadd.s32 %v90, 32
    %v123 = vsel %vm107, %v115, %v41
    %v124 = vsel %vm108, %v116, %v48
    %v125 = vsel %vm109, %v117, %v55
    %v126 = vsel %vm110, %v118, %v62
    %v127 = vsel %vm111, %v119, %v69
    %v128 = vsel %vm112, %v120, %v76
    %v129 = vsel %vm113, %v121, %v83
    %v130 = vsel %vm114, %v122, %v90
    %v131 = vld [vmem:[#allocation2 + $0x280] sm:$0xf]
    %v132 = vunpack.c.l.bf16 %v131
    %v133 = vld [vmem:[%s0] sm:$0xff]
    %v134 = vld [vmem:[%s0 + $0x8] sm:$0xff]
    %v135 = vld [vmem:[%s0 + $0x10] sm:$0xff]
    %v136 = vld [vmem:[%s0 + $0x18] sm:$0xff]
    %v137 = vld [vmem:[%s0 + $0x20] sm:$0xff]
    %v138 = vld [vmem:[%s0 + $0x28] sm:$0xff]
    %v139 = vld [vmem:[%s0 + $0x30] sm:$0xff]
    %v140 = vld [vmem:[%s0 + $0x38] sm:$0xff]
    %v141 = vld [vmem:[#allocation2] sm:$0xf]
    %v142 = vld [vmem:[#allocation2 + $0x4] sm:$0xf]
    %v143 = vld [vmem:[#allocation2 + $0x8] sm:$0xf]
    %v144 = vld [vmem:[#allocation2 + $0xc] sm:$0xf]
    %v145 = vld [vmem:[#allocation2 + $0x10] sm:$0xf]
    %v146 = vld [vmem:[#allocation2 + $0x14] sm:$0xf]
    %v147 = vld [vmem:[#allocation2 + $0x18] sm:$0xf]
    %v148 = vld [vmem:[#allocation2 + $0x1c] sm:$0xf]
    %v149 = vld [vmem:[#allocation2 + $0x20] sm:$0xf]
    %v150 = vld [vmem:[#allocation2 + $0x24] sm:$0xf]
    %v151 = vld [vmem:[#allocation2 + $0x28] sm:$0xf]
    %v152 = vld [vmem:[#allocation2 + $0x2c] sm:$0xf]
    %v153 = vld [vmem:[#allocation2 + $0x30] sm:$0xf]
    %v154 = vld [vmem:[#allocation2 + $0x34] sm:$0xf]
    %v155 = vld [vmem:[#allocation2 + $0x38] sm:$0xf]
    %v156 = vld [vmem:[#allocation2 + $0x3c] sm:$0xf]
    %v157 = vunpack.c.l.bf16 %v141
    %v158 = vunpack.c.l.bf16 %v142
    %v159 = vunpack.c.l.bf16 %v143
    %v160 = vunpack.c.l.bf16 %v144
    %v161 = vunpack.c.l.bf16 %v145
    %v162 = vunpack.c.l.bf16 %v146
    %v163 = vunpack.c.l.bf16 %v147
    %v164 = vunpack.c.l.bf16 %v148
    %v165 = vunpack.c.l.bf16 %v149
    %v166 = vunpack.c.l.bf16 %v150
    %v167 = vunpack.c.l.bf16 %v151
    %v168 = vunpack.c.l.bf16 %v152
    %v169 = vunpack.c.l.bf16 %v153
    %v170 = vunpack.c.l.bf16 %v154
    %v171 = vunpack.c.l.bf16 %v155
    %v172 = vunpack.c.l.bf16 %v156
    %v173 = vld [vmem:[#allocation2 + $0x40] sm:$0xf]
    %v174 = vld [vmem:[#allocation2 + $0x44] sm:$0xf]
    %v175 = vld [vmem:[#allocation2 + $0x48] sm:$0xf]
    %v176 = vld [vmem:[#allocation2 + $0x4c] sm:$0xf]
    %v177 = vld [vmem:[#allocation2 + $0x50] sm:$0xf]
    %v178 = vld [vmem:[#allocation2 + $0x54] sm:$0xf]
    %v179 = vld [vmem:[#allocation2 + $0x58] sm:$0xf]
    %v180 = vld [vmem:[#allocation2 + $0x5c] sm:$0xf]
    %v181 = vld [vmem:[#allocation2 + $0x60] sm:$0xf]
    %v182 = vld [vmem:[#allocation2 + $0x64] sm:$0xf]
    %v183 = vld [vmem:[#allocation2 + $0x68] sm:$0xf]
    %v184 = vld [vmem:[#allocation2 + $0x6c] sm:$0xf]
    %v185 = vld [vmem:[#allocation2 + $0x70] sm:$0xf]
    %v186 = vld [vmem:[#allocation2 + $0x74] sm:$0xf]
    %v187 = vld [vmem:[#allocation2 + $0x78] sm:$0xf]
    %v188 = vld [vmem:[#allocation2 + $0x7c] sm:$0xf]
    %v189 = vunpack.c.l.bf16 %v173
    %v190 = vunpack.c.l.bf16 %v174
    %v191 = vunpack.c.l.bf16 %v175
    %v192 = vunpack.c.l.bf16 %v176
    %v193 = vunpack.c.l.bf16 %v177
    %v194 = vunpack.c.l.bf16 %v178
    %v195 = vunpack.c.l.bf16 %v179
    %v196 = vunpack.c.l.bf16 %v180
    %v197 = vunpack.c.l.bf16 %v181
    %v198 = vunpack.c.l.bf16 %v182
    %v199 = vunpack.c.l.bf16 %v183
    %v200 = vunpack.c.l.bf16 %v184
    %v201 = vunpack.c.l.bf16 %v185
    %v202 = vunpack.c.l.bf16 %v186
    %v203 = vunpack.c.l.bf16 %v187
    %v204 = vunpack.c.l.bf16 %v188
    %v205 = vrot.slane %v133, 7
    %v206 = vrot.slane %v134, 7
    %v207 = vrot.slane %v135, 7
    %v208 = vrot.slane %v136, 7
    %v209 = vrot.slane %v137, 7
    %v210 = vrot.slane %v138, 7
    %v211 = vrot.slane %v139, 7
    %v212 = vrot.slane %v140, 7
    %vm213 = vcmp.lt.s32.totalorder %v27, 1
    %v214 = vsel %vm213, %v211, %v212
    %v215 = vsel %vm213, %v210, %v211
    %v216 = vsel %vm213, %v209, %v210
    %v217 = vsel %vm213, %v208, %v209
    %v218 = vsel %vm213, %v207, %v208
    %v219 = vsel %vm213, %v206, %v207
    %v220 = vsel %vm213, %v205, %v206
    %v221 = vsel %vm213, %v212, %v205
    %vm222 = vcmp.ge.s32.totalorder %v123, 1
    %vm223 = vcmp.ge.s32.totalorder %v124, 1
    %vm224 = vcmp.ge.s32.totalorder %v125, 1
    %vm225 = vcmp.ge.s32.totalorder %v126, 1
    %vm226 = vcmp.ge.s32.totalorder %v127, 1
    %vm227 = vcmp.ge.s32.totalorder %v128, 1
    %vm228 = vcmp.ge.s32.totalorder %v129, 1
    %vm229 = vcmp.ge.s32.totalorder %v130, 1
    %v230 = vsel %vm222, %v221, 0.0
    %v231 = vsel %vm223, %v220, 0.0
    %v232 = vsel %vm224, %v219, 0.0
    %v233 = vsel %vm225, %v218, 0.0
    %v234 = vsel %vm226, %v217, 0.0
    %v235 = vsel %vm227, %v216, 0.0
    %v236 = vsel %vm228, %v215, 0.0
    %v237 = vsel %vm229, %v214, 0.0
    %238 = vmatprep.subr.mxu0 0.0
    %239 = vmatpush1.msra.mxu0 %v189
    %240 = vmatprep.subr.mxu0 0.0
    %241 = vmatpush1.msra.mxu0 %v190
    %242 = vmatprep.subr.mxu0 0.0
    %243 = vmatpush1.msra.mxu0 %v191
    %244 = vmatprep.subr.mxu0 0.0
    %245 = vmatpush1.msra.mxu0 %v192
    %246 = vmatprep.subr.mxu0 0.0
    %247 = vmatpush1.msra.mxu0 %v193
    %248 = vmatprep.subr.mxu0 0.0
    %249 = vmatpush1.msra.mxu0 %v194
    %250 = vmatprep.subr.mxu0 0.0
    %251 = vmatpush1.msra.mxu0 %v195
    %252 = vmatprep.subr.mxu0 0.0
    %253 = vmatpush1.msra.mxu0 %v196
    %254 = vmatprep.subr.mxu0 0.0
    %255 = vmatpush1.msra.mxu0 %v197
    %256 = vmatprep.subr.mxu0 0.0
    %257 = vmatpush1.msra.mxu0 %v198
    %258 = vmatprep.subr.mxu0 0.0
    %259 = vmatpush1.msra.mxu0 %v199
    %260 = vmatprep.subr.mxu0 0.0
    %261 = vmatpush1.msra.mxu0 %v200
    %262 = vmatprep.subr.mxu0 0.0
    %263 = vmatpush1.msra.mxu0 %v201
    %264 = vmatprep.subr.mxu0 0.0
    %265 = vmatpush1.msra.mxu0 %v202
    %266 = vmatprep.subr.mxu0 0.0
    %267 = vmatpush1.msra.mxu0 %v203
    %268 = vmatprep.subr.mxu0 0.0
    %269 = vmatpush1.msra.mxu0 %v204
    %270 = vmatprep.subr.mxu0 0.0
    %271 = vmatpush1.msra.mxu0 0.0
    %272 = vmatprep.subr.mxu0 0.0
    %273 = vmatpush1.msra.mxu0 0.0
    %274 = vmatprep.subr.mxu0 0.0
    %275 = vmatpush1.msra.mxu0 0.0
    %276 = vmatprep.subr.mxu0 0.0
    %277 = vmatpush1.msra.mxu0 0.0
    %278 = vmatprep.subr.mxu0 0.0
    %279 = vmatpush1.msra.mxu0 0.0
    %280 = vmatprep.subr.mxu0 0.0
    %281 = vmatpush1.msra.mxu0 0.0
    %282 = vmatprep.subr.mxu0 0.0
    %283 = vmatpush1.msra.mxu0 0.0
    %284 = vmatprep.subr.mxu0 0.0
    %285 = vmatpush1.msra.mxu0 0.0
    %286 = vmatprep.subr.mxu0 0.0
    %287 = vmatpush1.msra.mxu0 0.0
    %288 = vmatprep.subr.mxu0 0.0
    %289 = vmatpush1.msra.mxu0 0.0
    %290 = vmatprep.subr.mxu0 0.0
    %291 = vmatpush1.msra.mxu0 0.0
    %292 = vmatprep.subr.mxu0 0.0
    %293 = vmatpush1.msra.mxu0 0.0
    %294 = vmatprep.subr.mxu0 0.0
    %295 = vmatpush1.msra.mxu0 0.0
    %296 = vmatprep.subr.mxu0 0.0
    %297 = vmatpush1.msra.mxu0 0.0
    %298 = vmatprep.subr.mxu0 0.0
    %299 = vmatpush1.msra.mxu0 0.0
    %300 = vmatprep.subr.mxu0 0.0
    %301 = vmatpush1.msra.mxu0 0.0
    %302 = vmatprep.mubr.f32.mxu0 0.0
    %303 = vmatmul.mubr.f32.gmra.mrb[0].mxu0 %v133
    %v304 = vpop.f32.mrb[0].mxu0
    %v305 = vadd.f32 0.0, %v304
    %v306 = vpop.f32.mrb[0].mxu0
    %307 = vmatprep.mubr.f32.mxu0 0.0
    %308 = vmatmul.mubr.f32.gmra.mrb[0].mxu0 %v134
    %v309 = vpop.f32.mrb[0].mxu0
    %v310 = vadd.f32 0.0, %v309
    %v311 = vpop.f32.mrb[0].mxu0
    %312 = vmatprep.mubr.f32.mxu0 0.0
    %313 = vmatmul.mubr.f32.gmra.mrb[0].mxu0 %v135
    %v314 = vpop.f32.mrb[0].mxu0
    %v315 = vadd.f32 0.0, %v314
    %v316 = vpop.f32.mrb[0].mxu0
    %317 = vmatprep.mubr.f32.mxu0 0.0
    %318 = vmatmul.mubr.f32.gmra.mrb[0].mxu0 %v136
    %v319 = vpop.f32.mrb[0].mxu0
    %v320 = vadd.f32 0.0, %v319
    %v321 = vpop.f32.mrb[0].mxu0
    %322 = vmatprep.mubr.f32.mxu0 0.0
    %323 = vmatmul.mubr.f32.gmra.mrb[0].mxu0 %v137
    %v324 = vpop.f32.mrb[0].mxu0
    %v325 = vadd.f32 0.0, %v324
    %v326 = vpop.f32.mrb[0].mxu0
    %327 = vmatprep.mubr.f32.mxu0 0.0
    %328 = vmatmul.mubr.f32.gmra.mrb[0].mxu0 %v138
    %v329 = vpop.f32.mrb[0].mxu0
    %v330 = vadd.f32 0.0, %v329
    %v331 = vpop.f32.mrb[0].mxu0
    %332 = vmatprep.mubr.f32.mxu0 0.0
    %333 = vmatmul.mubr.f32.gmra.mrb[0].mxu0 %v139
    %v334 = vpop.f32.mrb[0].mxu0
    %v335 = vadd.f32 0.0, %v334
    %v336 = vpop.f32.mrb[0].mxu0
    %337 = vmatprep.mubr.f32.mxu0 0.0
    %338 = vmatmul.mubr.f32.gmra.mrb[0].mxu0 %v140
    %v339 = vpop.f32.mrb[0].mxu0
    %v340 = vadd.f32 0.0, %v339
    %v341 = vpop.f32.mrb[0].mxu0
    %342 = vdwg.mxu0
    %343 = vmatprep.subr.mxu0 0.0
    %344 = vmatpush1.msra.mxu0 %v157
    %345 = vmatprep.subr.mxu0 0.0
    %346 = vmatpush1.msra.mxu0 %v158
    %347 = vmatprep.subr.mxu0 0.0
    %348 = vmatpush1.msra.mxu0 %v159
    %349 = vmatprep.subr.mxu0 0.0
    %350 = vmatpush1.msra.mxu0 %v160
    %351 = vmatprep.subr.mxu0 0.0
    %352 = vmatpush1.msra.mxu0 %v161
    %353 = vmatprep.subr.mxu0 0.0
    %354 = vmatpush1.msra.mxu0 %v162
    %355 = vmatprep.subr.mxu0 0.0
    %356 = vmatpush1.msra.mxu0 %v163
    %357 = vmatprep.subr.mxu0 0.0
    %358 = vmatpush1.msra.mxu0 %v164
    %359 = vmatprep.subr.mxu0 0.0
    %360 = vmatpush1.msra.mxu0 %v165
    %361 = vmatprep.subr.mxu0 0.0
    %362 = vmatpush1.msra.mxu0 %v166
    %363 = vmatprep.subr.mxu0 0.0
    %364 = vmatpush1.msra.mxu0 %v167
    %365 = vmatprep.subr.mxu0 0.0
    %366 = vmatpush1.msra.mxu0 %v168
    %367 = vmatprep.subr.mxu0 0.0
    %368 = vmatpush1.msra.mxu0 %v169
    %369 = vmatprep.subr.mxu0 0.0
    %370 = vmatpush1.msra.mxu0 %v170
    %371 = vmatprep.subr.mxu0 0.0
    %372 = vmatpush1.msra.mxu0 %v171
    %373 = vmatprep.subr.mxu0 0.0
    %374 = vmatpush1.msra.mxu0 %v172
    %375 = vmatprep.subr.mxu0 0.0
    %376 = vmatpush1.msra.mxu0 0.0
    %377 = vmatprep.subr.mxu0 0.0
    %378 = vmatpush1.msra.mxu0 0.0
    %379 = vmatprep.subr.mxu0 0.0
    %380 = vmatpush1.msra.mxu0 0.0
    %381 = vmatprep.subr.mxu0 0.0
    %382 = vmatpush1.msra.mxu0 0.0
    %383 = vmatprep.subr.mxu0 0.0
    %384 = vmatpush1.msra.mxu0 0.0
    %385 = vmatprep.subr.mxu0 0.0
    %386 = vmatpush1.msra.mxu0 0.0
    %387 = vmatprep.subr.mxu0 0.0
    %388 = vmatpush1.msra.mxu0 0.0
    %389 = vmatprep.subr.mxu0 0.0
    %390 = vmatpush1.msra.mxu0 0.0
    %391 = vmatprep.subr.mxu0 0.0
    %392 = vmatpush1.msra.mxu0 0.0
    %393 = vmatprep.subr.mxu0 0.0
    %394 = vmatpush1.msra.mxu0 0.0
    %395 = vmatprep.subr.mxu0 0.0
    %396 = vmatpush1.msra.mxu0 0.0
    %397 = vmatprep.subr.mxu0 0.0
    %398 = vmatpush1.msra.mxu0 0.0
    %399 = vmatprep.subr.mxu0 0.0
    %400 = vmatpush1.msra.mxu0 0.0
    %401 = vmatprep.subr.mxu0 0.0
    %402 = vmatpush1.msra.mxu0 0.0
    %403 = vmatprep.subr.mxu0 0.0
    %404 = vmatpush1.msra.mxu0 0.0
    %405 = vmatprep.subr.mxu0 0.0
    %406 = vmatpush1.msra.mxu0 0.0
    %407 = vmatprep.mubr.f32.mxu0 0.0
    %408 = vmatmul.mubr.f32.gmra.mrb[0].mxu0 %v230
    %v409 = vpop.f32.mrb[0].mxu0
    %v410 = vadd.f32 %v305, %v409
    %v411 = vpop.f32.mrb[0].mxu0
    %412 = vmatprep.mubr.f32.mxu0 0.0
    %413 = vmatmul.mubr.f32.gmra.mrb[0].mxu0 %v231
    %v414 = vpop.f32.mrb[0].mxu0
    %v415 = vadd.f32 %v310, %v414
    %v416 = vpop.f32.mrb[0].mxu0
    %417 = vmatprep.mubr.f32.mxu0 0.0
    %418 = vmatmul.mubr.f32.gmra.mrb[0].mxu0 %v232
    %v419 = vpop.f32.mrb[0].mxu0
    %v420 = vadd.f32 %v315, %v419
    %v421 = vpop.f32.mrb[0].mxu0
    %422 = vmatprep.mubr.f32.mxu0 0.0
    %423 = vmatmul.mubr.f32.gmra.mrb[0].mxu0 %v233
    %v424 = vpop.f32.mrb[0].mxu0
    %v425 = vadd.f32 %v320, %v424
    %v426 = vpop.f32.mrb[0].mxu0
    %427 = vmatprep.mubr.f32.mxu0 0.0
    %428 = vmatmul.mubr.f32.gmra.mrb[0].mxu0 %v234
    %v429 = vpop.f32.mrb[0].mxu0
    %v430 = vadd.f32 %v325, %v429
    %v431 = vpop.f32.mrb[0].mxu0
    %432 = vmatprep.mubr.f32.mxu0 0.0
    %433 = vmatmul.mubr.f32.gmra.mrb[0].mxu0 %v235
    %v434 = vpop.f32.mrb[0].mxu0
    %v435 = vadd.f32 %v330, %v434
    %v436 = vpop.f32.mrb[0].mxu0
    %437 = vmatprep.mubr.f32.mxu0 0.0
    %438 = vmatmul.mubr.f32.gmra.mrb[0].mxu0 %v236
    %v439 = vpop.f32.mrb[0].mxu0
    %v440 = vadd.f32 %v335, %v439
    %v441 = vpop.f32.mrb[0].mxu0
    %442 = vmatprep.mubr.f32.mxu0 0.0
    %443 = vmatmul.mubr.f32.gmra.mrb[0].mxu0 %v237
    %v444 = vpop.f32.mrb[0].mxu0
    %v445 = vadd.f32 %v340, %v444
    %v446 = vpop.f32.mrb[0].mxu0
    %447 = vdwg.mxu0
    %v448 = vlaneseq
    %v449 = vshrl.u32 %v448, 7
    %v450 = vsub.s32 0, %v449
    %v451 = vrot.slane %v132, %v450
    %v452 = vadd.f32 %v410, %v451
    %v453 = vadd.f32 %v415, %v451
    %v454 = vadd.f32 %v420, %v451
    %v455 = vadd.f32 %v425, %v451
    %v456 = vadd.f32 %v430, %v451
    %v457 = vadd.f32 %v435, %v451
    %v458 = vadd.f32 %v440, %v451
    %v459 = vadd.f32 %v445, %v451
    %vm460 = vcmp.gt.f32.partialorder %v452, 0.0
    %vm461 = vcmp.gt.f32.partialorder %v453, 0.0
    %vm462 = vcmp.gt.f32.partialorder %v454, 0.0
    %vm463 = vcmp.gt.f32.partialorder %v455, 0.0
    %vm464 = vcmp.gt.f32.partialorder %v456, 0.0
    %vm465 = vcmp.gt.f32.partialorder %v457, 0.0
    %vm466 = vcmp.gt.f32.partialorder %v458, 0.0
    %vm467 = vcmp.gt.f32.partialorder %v459, 0.0
    %v468 = vmul.f32 %v452, 0.1
    %v469 = vmul.f32 %v453, 0.1
    %v470 = vmul.f32 %v454, 0.1
    %v471 = vmul.f32 %v455, 0.1
    %v472 = vmul.f32 %v456, 0.1
    %v473 = vmul.f32 %v457, 0.1
    %v474 = vmul.f32 %v458, 0.1
    %v475 = vmul.f32 %v459, 0.1
    %v476 = vsel %vm460, %v452, %v468
    %v477 = vsel %vm461, %v453, %v469
    %v478 = vsel %vm462, %v454, %v470
    %v479 = vsel %vm463, %v455, %v471
    %v480 = vsel %vm464, %v456, %v472
    %v481 = vsel %vm465, %v457, %v473
    %v482 = vsel %vm466, %v458, %v474
    %v483 = vsel %vm467, %v459, %v475
    %v484 = vld [vmem:[#allocation2 + $0x80] sm:$0xf]
    %v485 = vld [vmem:[#allocation2 + $0x84] sm:$0xf]
    %v486 = vld [vmem:[#allocation2 + $0x88] sm:$0xf]
    %v487 = vld [vmem:[#allocation2 + $0x8c] sm:$0xf]
    %v488 = vld [vmem:[#allocation2 + $0x90] sm:$0xf]
    %v489 = vld [vmem:[#allocation2 + $0x94] sm:$0xf]
    %v490 = vld [vmem:[#allocation2 + $0x98] sm:$0xf]
    %v491 = vld [vmem:[#allocation2 + $0x9c] sm:$0xf]
    %v492 = vld [vmem:[#allocation2 + $0xa0] sm:$0xf]
    %v493 = vld [vmem:[#allocation2 + $0xa4] sm:$0xf]
    %v494 = vld [vmem:[#allocation2 + $0xa8] sm:$0xf]
    %v495 = vld [vmem:[#allocation2 + $0xac] sm:$0xf]
    %v496 = vld [vmem:[#allocation2 + $0xb0] sm:$0xf]
    %v497 = vld [vmem:[#allocation2 + $0xb4] sm:$0xf]
    %v498 = vld [vmem:[#allocation2 + $0xb8] sm:$0xf]
    %v499 = vld [vmem:[#allocation2 + $0xbc] sm:$0xf]
    %v500 = vunpack.c.l.bf16 %v484
    %v501 = vunpack.c.l.bf16 %v485
    %v502 = vunpack.c.l.bf16 %v486
    %v503 = vunpack.c.l.bf16 %v487
    %v504 = vunpack.c.l.bf16 %v488
    %v505 = vunpack.c.l.bf16 %v489
    %v506 = vunpack.c.l.bf16 %v490
    %v507 = vunpack.c.l.bf16 %v491
    %v508 = vunpack.c.l.bf16 %v492
    %v509 = vunpack.c.l.bf16 %v493
    %v510 = vunpack.c.l.bf16 %v494
    %v511 = vunpack.c.l.bf16 %v495
    %v512 = vunpack.c.l.bf16 %v496
    %v513 = vunpack.c.l.bf16 %v497
    %v514 = vunpack.c.l.bf16 %v498
    %v515 = vunpack.c.l.bf16 %v499
    %v516 = vld [vmem:[#allocation2 + $0xc0] sm:$0xf]
    %v517 = vld [vmem:[#allocation2 + $0xc4] sm:$0xf]
    %v518 = vld [vmem:[#allocation2 + $0xc8] sm:$0xf]
    %v519 = vld [vmem:[#allocation2 + $0xcc] sm:$0xf]
    %v520 = vld [vmem:[#allocation2 + $0xd0] sm:$0xf]
    %v521 = vld [vmem:[#allocation2 + $0xd4] sm:$0xf]
    %v522 = vld [vmem:[#allocation2 + $0xd8] sm:$0xf]
    %v523 = vld [vmem:[#allocation2 + $0xdc] sm:$0xf]
    %v524 = vld [vmem:[#allocation2 + $0xe0] sm:$0xf]
    %v525 = vld [vmem:[#allocation2 + $0xe4] sm:$0xf]
    %v526 = vld [vmem:[#allocation2 + $0xe8] sm:$0xf]
    %v527 = vld [vmem:[#allocation2 + $0xec] sm:$0xf]
    %v528 = vld [vmem:[#allocation2 + $0xf0] sm:$0xf]
    %v529 = vld [vmem:[#allocation2 + $0xf4] sm:$0xf]
    %v530 = vld [vmem:[#allocation2 + $0xf8] sm:$0xf]
    %v531 = vld [vmem:[#allocation2 + $0xfc] sm:$0xf]
    %v532 = vunpack.c.l.bf16 %v516
    %v533 = vunpack.c.l.bf16 %v517
    %v534 = vunpack.c.l.bf16 %v518
    %v535 = vunpack.c.l.bf16 %v519
    %v536 = vunpack.c.l.bf16 %v520
    %v537 = vunpack.c.l.bf16 %v521
    %v538 = vunpack.c.l.bf16 %v522
    %v539 = vunpack.c.l.bf16 %v523
    %v540 = vunpack.c.l.bf16 %v524
    %v541 = vunpack.c.l.bf16 %v525
    %v542 = vunpack.c.l.bf16 %v526
    %v543 = vunpack.c.l.bf16 %v527
    %v544 = vunpack.c.l.bf16 %v528
    %v545 = vunpack.c.l.bf16 %v529
    %v546 = vunpack.c.l.bf16 %v530
    %v547 = vunpack.c.l.bf16 %v531
    %v548 = vrot.slane %v476, 6
    %v549 = vrot.slane %v477, 6
    %v550 = vrot.slane %v478, 6
    %v551 = vrot.slane %v479, 6
    %v552 = vrot.slane %v480, 6
    %v553 = vrot.slane %v481, 6
    %v554 = vrot.slane %v482, 6
    %v555 = vrot.slane %v483, 6
    %vm556 = vcmp.lt.s32.totalorder %v27, 2
    %v557 = vsel %vm556, %v554, %v555
    %v558 = vsel %vm556, %v553, %v554
    %v559 = vsel %vm556, %v552, %v553
    %v560 = vsel %vm556, %v551, %v552
    %v561 = vsel %vm556, %v550, %v551
    %v562 = vsel %vm556, %v549, %v550
    %v563 = vsel %vm556, %v548, %v549
    %v564 = vsel %vm556, %v555, %v548
    %vm565 = vcmp.ge.s32.totalorder %v123, 2
    %vm566 = vcmp.ge.s32.totalorder %v124, 2
    %vm567 = vcmp.ge.s32.totalorder %v125, 2
    %vm568 = vcmp.ge.s32.totalorder %v126, 2
    %vm569 = vcmp.ge.s32.totalorder %v127, 2
    %vm570 = vcmp.ge.s32.totalorder %v128, 2
    %vm571 = vcmp.ge.s32.totalorder %v129, 2
    %vm572 = vcmp.ge.s32.totalorder %v130, 2
    %v573 = vsel %vm565, %v564, 0.0
    %v574 = vsel %vm566, %v563, 0.0
    %v575 = vsel %vm567, %v562, 0.0
    %v576 = vsel %vm568, %v561, 0.0
    %v577 = vsel %vm569, %v560, 0.0
    %v578 = vsel %vm570, %v559, 0.0
    %v579 = vsel %vm571, %v558, 0.0
    %v580 = vsel %vm572, %v557, 0.0
    %581 = vmatprep.subr.mxu0 0.0
    %582 = vmatpush1.msra.mxu0 %v532
    %583 = vmatprep.subr.mxu0 0.0
    %584 = vmatpush1.msra.mxu0 %v533
    %585 = vmatprep.subr.mxu0 0.0
    %586 = vmatpush1.msra.mxu0 %v534
    %587 = vmatprep.subr.mxu0 0.0
    %588 = vmatpush1.msra.mxu0 %v535
    %589 = vmatprep.subr.mxu0 0.0
    %590 = vmatpush1.msra.mxu0 %v536
    %591 = vmatprep.subr.mxu0 0.0
    %592 = vmatpush1.msra.mxu0 %v537
    %593 = vmatprep.subr.mxu0 0.0
    %594 = vmatpush1.msra.mxu0 %v538
    %595 = vmatprep.subr.mxu0 0.0
    %596 = vmatpush1.msra.mxu0 %v539
    %597 = vmatprep.subr.mxu0 0.0
    %598 = vmatpush1.msra.mxu0 %v540
    %599 = vmatprep.subr.mxu0 0.0
    %600 = vmatpush1.msra.mxu0 %v541
    %601 = vmatprep.subr.mxu0 0.0
    %602 = vmatpush1.msra.mxu0 %v542
    %603 = vmatprep.subr.mxu0 0.0
    %604 = vmatpush1.msra.mxu0 %v543
    %605 = vmatprep.subr.mxu0 0.0
    %606 = vmatpush1.msra.mxu0 %v544
    %607 = vmatprep.subr.mxu0 0.0
    %608 = vmatpush1.msra.mxu0 %v545
    %609 = vmatprep.subr.mxu0 0.0
    %610 = vmatpush1.msra.mxu0 %v546
    %611 = vmatprep.subr.mxu0 0.0
    %612 = vmatpush1.msra.mxu0 %v547
    %613 = vmatprep.subr.mxu0 0.0
    %614 = vmatpush1.msra.mxu0 0.0
    %615 = vmatprep.subr.mxu0 0.0
    %616 = vmatpush1.msra.mxu0 0.0
    %617 = vmatprep.subr.mxu0 0.0
    %618 = vmatpush1.msra.mxu0 0.0
    %619 = vmatprep.subr.mxu0 0.0
    %620 = vmatpush1.msra.mxu0 0.0
    %621 = vmatprep.subr.mxu0 0.0
    %622 = vmatpush1.msra.mxu0 0.0
    %623 = vmatprep.subr.mxu0 0.0
    %624 = vmatpush1.msra.mxu0 0.0
    %625 = vmatprep.subr.mxu0 0.0
    %626 = vmatpush1.msra.mxu0 0.0
    %627 = vmatprep.subr.mxu0 0.0
    %628 = vmatpush1.msra.mxu0 0.0
    %629 = vmatprep.subr.mxu0 0.0
    %630 = vmatpush1.msra.mxu0 0.0
    %631 = vmatprep.subr.mxu0 0.0
    %632 = vmatpush1.msra.mxu0 0.0
    %633 = vmatprep.subr.mxu0 0.0
    %634 = vmatpush1.msra.mxu0 0.0
    %635 = vmatprep.subr.mxu0 0.0
    %636 = vmatpush1.msra.mxu0 0.0
    %637 = vmatprep.subr.mxu0 0.0
    %638 = vmatpush1.msra.mxu0 0.0
    %639 = vmatprep.subr.mxu0 0.0
    %640 = vmatpush1.msra.mxu0 0.0
    %641 = vmatprep.subr.mxu0 0.0
    %642 = vmatpush1.msra.mxu0 0.0
    %643 = vmatprep.subr.mxu0 0.0
    %644 = vmatpush1.msra.mxu0 0.0
    %645 = vmatprep.mubr.f32.mxu0 0.0
    %646 = vmatmul.mubr.f32.gmra.mrb[0].mxu0 %v476
    %v647 = vpop.f32.mrb[0].mxu0
    %v648 = vadd.f32 0.0, %v647
    %v649 = vpop.f32.mrb[0].mxu0
    %650 = vmatprep.mubr.f32.mxu0 0.0
    %651 = vmatmul.mubr.f32.gmra.mrb[0].mxu0 %v477
    %v652 = vpop.f32.mrb[0].mxu0
    %v653 = vadd.f32 0.0, %v652
    %v654 = vpop.f32.mrb[0].mxu0
    %655 = vmatprep.mubr.f32.mxu0 0.0
    %656 = vmatmul.mubr.f32.gmra.mrb[0].mxu0 %v478
    %v657 = vpop.f32.mrb[0].mxu0
    %v658 = vadd.f32 0.0, %v657
    %v659 = vpop.f32.mrb[0].mxu0
    %660 = vmatprep.mubr.f32.mxu0 0.0
    %661 = vmatmul.mubr.f32.gmra.mrb[0].mxu0 %v479
    %v662 = vpop.f32.mrb[0].mxu0
    %v663 = vadd.f32 0.0, %v662
    %v664 = vpop.f32.mrb[0].mxu0
    %665 = vmatprep.mubr.f32.mxu0 0.0
    %666 = vmatmul.mubr.f32.gmra.mrb[0].mxu0 %v480
    %v667 = vpop.f32.mrb[0].mxu0
    %v668 = vadd.f32 0.0, %v667
    %v669 = vpop.f32.mrb[0].mxu0
    %670 = vmatprep.mubr.f32.mxu0 0.0
    %671 = vmatmul.mubr.f32.gmra.mrb[0].mxu0 %v481
    %v672 = vpop.f32.mrb[0].mxu0
    %v673 = vadd.f32 0.0, %v672
    %v674 = vpop.f32.mrb[0].mxu0
    %675 = vmatprep.mubr.f32.mxu0 0.0
    %676 = vmatmul.mubr.f32.gmra.mrb[0].mxu0 %v482
    %v677 = vpop.f32.mrb[0].mxu0
    %v678 = vadd.f32 0.0, %v677
    %v679 = vpop.f32.mrb[0].mxu0
    %680 = vmatprep.mubr.f32.mxu0 0.0
    %681 = vmatmul.mubr.f32.gmra.mrb[0].mxu0 %v483
    %v682 = vpop.f32.mrb[0].mxu0
    %v683 = vadd.f32 0.0, %v682
    %v684 = vpop.f32.mrb[0].mxu0
    %685 = vdwg.mxu0
    %686 = vmatprep.subr.mxu0 0.0
    %687 = vmatpush1.msra.mxu0 %v500
    %688 = vmatprep.subr.mxu0 0.0
    %689 = vmatpush1.msra.mxu0 %v501
    %690 = vmatprep.subr.mxu0 0.0
    %691 = vmatpush1.msra.mxu0 %v502
    %692 = vmatprep.subr.mxu0 0.0
    %693 = vmatpush1.msra.mxu0 %v503
    %694 = vmatprep.subr.mxu0 0.0
    %695 = vmatpush1.msra.mxu0 %v504
    %696 = vmatprep.subr.mxu0 0.0
    %697 = vmatpush1.msra.mxu0 %v505
    %698 = vmatprep.subr.mxu0 0.0
    %699 = vmatpush1.msra.mxu0 %v506
    %700 = vmatprep.subr.mxu0 0.0
    %701 = vmatpush1.msra.mxu0 %v507
    %702 = vmatprep.subr.mxu0 0.0
    %703 = vmatpush1.msra.mxu0 %v508
    %704 = vmatprep.subr.mxu0 0.0
    %705 = vmatpush1.msra.mxu0 %v509
    %706 = vmatprep.subr.mxu0 0.0
    %707 = vmatpush1.msra.mxu0 %v510
    %708 = vmatprep.subr.mxu0 0.0
    %709 = vmatpush1.msra.mxu0 %v511
    %710 = vmatprep.subr.mxu0 0.0
    %711 = vmatpush1.msra.mxu0 %v512
    %712 = vmatprep.subr.mxu0 0.0
    %713 = vmatpush1.msra.mxu0 %v513
    %714 = vmatprep.subr.mxu0 0.0
    %715 = vmatpush1.msra.mxu0 %v514
    %716 = vmatprep.subr.mxu0 0.0
    %717 = vmatpush1.msra.mxu0 %v515
    %718 = vmatprep.subr.mxu0 0.0
    %719 = vmatpush1.msra.mxu0 0.0
    %720 = vmatprep.subr.mxu0 0.0
    %721 = vmatpush1.msra.mxu0 0.0
    %722 = vmatprep.subr.mxu0 0.0
    %723 = vmatpush1.msra.mxu0 0.0
    %724 = vmatprep.subr.mxu0 0.0
    %725 = vmatpush1.msra.mxu0 0.0
    %726 = vmatprep.subr.mxu0 0.0
    %727 = vmatpush1.msra.mxu0 0.0
    %728 = vmatprep.subr.mxu0 0.0
    %729 = vmatpush1.msra.mxu0 0.0
    %730 = vmatprep.subr.mxu0 0.0
    %731 = vmatpush1.msra.mxu0 0.0
    %732 = vmatprep.subr.mxu0 0.0
    %733 = vmatpush1.msra.mxu0 0.0
    %734 = vmatprep.subr.mxu0 0.0
    %735 = vmatpush1.msra.mxu0 0.0
    %736 = vmatprep.subr.mxu0 0.0
    %737 = vmatpush1.msra.mxu0 0.0
    %738 = vmatprep.subr.mxu0 0.0
    %739 = vmatpush1.msra.mxu0 0.0
    %740 = vmatprep.subr.mxu0 0.0
    %741 = vmatpush1.msra.mxu0 0.0
    %742 = vmatprep.subr.mxu0 0.0
    %743 = vmatpush1.msra.mxu0 0.0
    %744 = vmatprep.subr.mxu0 0.0
    %745 = vmatpush1.msra.mxu0 0.0
    %746 = vmatprep.subr.mxu0 0.0
    %747 = vmatpush1.msra.mxu0 0.0
    %748 = vmatprep.subr.mxu0 0.0
    %749 = vmatpush1.msra.mxu0 0.0
    %750 = vmatprep.mubr.f32.mxu0 0.0
    %751 = vmatmul.mubr.f32.gmra.mrb[0].mxu0 %v573
    %v752 = vpop.f32.mrb[0].mxu0
    %v753 = vadd.f32 %v648, %v752
    %v754 = vpop.f32.mrb[0].mxu0
    %755 = vmatprep.mubr.f32.mxu0 0.0
    %756 = vmatmul.mubr.f32.gmra.mrb[0].mxu0 %v574
    %v757 = vpop.f32.mrb[0].mxu0
    %v758 = vadd.f32 %v653, %v757
    %v759 = vpop.f32.mrb[0].mxu0
    %760 = vmatprep.mubr.f32.mxu0 0.0
    %761 = vmatmul.mubr.f32.gmra.mrb[0].mxu0 %v575
    %v762 = vpop.f32.mrb[0].mxu0
    %v763 = vadd.f32 %v658, %v762
    %v764 = vpop.f32.mrb[0].mxu0
    %765 = vmatprep.mubr.f32.mxu0 0.0
    %766 = vmatmul.mubr.f32.gmra.mrb[0].mxu0 %v576
    %v767 = vpop.f32.mrb[0].mxu0
    %v768 = vadd.f32 %v663, %v767
    %v769 = vpop.f32.mrb[0].mxu0
    %770 = vmatprep.mubr.f32.mxu0 0.0
    %771 = vmatmul.mubr.f32.gmra.mrb[0].mxu0 %v577
    %v772 = vpop.f32.mrb[0].mxu0
    %v773 = vadd.f32 %v668, %v772
    %v774 = vpop.f32.mrb[0].mxu0
    %775 = vmatprep.mubr.f32.mxu0 0.0
    %776 = vmatmul.mubr.f32.gmra.mrb[0].mxu0 %v578
    %v777 = vpop.f32.mrb[0].mxu0
    %v778 = vadd.f32 %v673, %v777
    %v779 = vpop.f32.mrb[0].mxu0
    %780 = vmatprep.mubr.f32.mxu0 0.0
    %781 = vmatmul.mubr.f32.gmra.mrb[0].mxu0 %v579
    %v782 = vpop.f32.mrb[0].mxu0
    %v783 = vadd.f32 %v678, %v782
    %v784 = vpop.f32.mrb[0].mxu0
    %785 = vmatprep.mubr.f32.mxu0 0.0
    %786 = vmatmul.mubr.f32.gmra.mrb[0].mxu0 %v580
    %v787 = vpop.f32.mrb[0].mxu0
    %v788 = vadd.f32 %v683, %v787
    %v789 = vpop.f32.mrb[0].mxu0
    %790 = vdwg.mxu0
    %v791 = vlaneseq
    %v792 = vshrl.u32 %v791, 7
    %v793 = vsub.s32 1, %v792
    %v794 = vrot.slane %v132, %v793
    %v795 = vadd.f32 %v753, %v794
    %v796 = vadd.f32 %v758, %v794
    %v797 = vadd.f32 %v763, %v794
    %v798 = vadd.f32 %v768, %v794
    %v799 = vadd.f32 %v773, %v794
    %v800 = vadd.f32 %v778, %v794
    %v801 = vadd.f32 %v783, %v794
    %v802 = vadd.f32 %v788, %v794
    %vm803 = vcmp.gt.f32.partialorder %v795, 0.0
    %vm804 = vcmp.gt.f32.partialorder %v796, 0.0
    %vm805 = vcmp.gt.f32.partialorder %v797, 0.0
    %vm806 = vcmp.gt.f32.partialorder %v798, 0.0
    %vm807 = vcmp.gt.f32.partialorder %v799, 0.0
    %vm808 = vcmp.gt.f32.partialorder %v800, 0.0
    %vm809 = vcmp.gt.f32.partialorder %v801, 0.0
    %vm810 = vcmp.gt.f32.partialorder %v802, 0.0
    %v811 = vmul.f32 %v795, 0.1
    %v812 = vmul.f32 %v796, 0.1
    %v813 = vmul.f32 %v797, 0.1
    %v814 = vmul.f32 %v798, 0.1
    %v815 = vmul.f32 %v799, 0.1
    %v816 = vmul.f32 %v800, 0.1
    %v817 = vmul.f32 %v801, 0.1
    %v818 = vmul.f32 %v802, 0.1
    %v819 = vsel %vm803, %v795, %v811
    %v820 = vsel %vm804, %v796, %v812
    %v821 = vsel %vm805, %v797, %v813
    %v822 = vsel %vm806, %v798, %v814
    %v823 = vsel %vm807, %v799, %v815
    %v824 = vsel %vm808, %v800, %v816
    %v825 = vsel %vm809, %v801, %v817
    %v826 = vsel %vm810, %v802, %v818
    %v827 = vld [vmem:[#allocation2 + $0x100] sm:$0xf]
    %v828 = vld [vmem:[#allocation2 + $0x104] sm:$0xf]
    %v829 = vld [vmem:[#allocation2 + $0x108] sm:$0xf]
    %v830 = vld [vmem:[#allocation2 + $0x10c] sm:$0xf]
    %v831 = vld [vmem:[#allocation2 + $0x110] sm:$0xf]
    %v832 = vld [vmem:[#allocation2 + $0x114] sm:$0xf]
    %v833 = vld [vmem:[#allocation2 + $0x118] sm:$0xf]
    %v834 = vld [vmem:[#allocation2 + $0x11c] sm:$0xf]
    %v835 = vld [vmem:[#allocation2 + $0x120] sm:$0xf]
    %v836 = vld [vmem:[#allocation2 + $0x124] sm:$0xf]
    %v837 = vld [vmem:[#allocation2 + $0x128] sm:$0xf]
    %v838 = vld [vmem:[#allocation2 + $0x12c] sm:$0xf]
    %v839 = vld [vmem:[#allocation2 + $0x130] sm:$0xf]
    %v840 = vld [vmem:[#allocation2 + $0x134] sm:$0xf]
    %v841 = vld [vmem:[#allocation2 + $0x138] sm:$0xf]
    %v842 = vld [vmem:[#allocation2 + $0x13c] sm:$0xf]
    %v843 = vunpack.c.l.bf16 %v827
    %v844 = vunpack.c.l.bf16 %v828
    %v845 = vunpack.c.l.bf16 %v829
    %v846 = vunpack.c.l.bf16 %v830
    %v847 = vunpack.c.l.bf16 %v831
    %v848 = vunpack.c.l.bf16 %v832
    %v849 = vunpack.c.l.bf16 %v833
    %v850 = vunpack.c.l.bf16 %v834
    %v851 = vunpack.c.l.bf16 %v835
    %v852 = vunpack.c.l.bf16 %v836
    %v853 = vunpack.c.l.bf16 %v837
    %v854 = vunpack.c.l.bf16 %v838
    %v855 = vunpack.c.l.bf16 %v839
    %v856 = vunpack.c.l.bf16 %v840
    %v857 = vunpack.c.l.bf16 %v841
    %v858 = vunpack.c.l.bf16 %v842
    %v859 = vld [vmem:[#allocation2 + $0x140] sm:$0xf]
    %v860 = vld [vmem:[#allocation2 + $0x144] sm:$0xf]
    %v861 = vld [vmem:[#allocation2 + $0x148] sm:$0xf]
    %v862 = vld [vmem:[#allocation2 + $0x14c] sm:$0xf]
    %v863 = vld [vmem:[#allocation2 + $0x150] sm:$0xf]
    %v864 = vld [vmem:[#allocation2 + $0x154] sm:$0xf]
    %v865 = vld [vmem:[#allocation2 + $0x158] sm:$0xf]
    %v866 = vld [vmem:[#allocation2 + $0x15c] sm:$0xf]
    %v867 = vld [vmem:[#allocation2 + $0x160] sm:$0xf]
    %v868 = vld [vmem:[#allocation2 + $0x164] sm:$0xf]
    %v869 = vld [vmem:[#allocation2 + $0x168] sm:$0xf]
    %v870 = vld [vmem:[#allocation2 + $0x16c] sm:$0xf]
    %v871 = vld [vmem:[#allocation2 + $0x170] sm:$0xf]
    %v872 = vld [vmem:[#allocation2 + $0x174] sm:$0xf]
    %v873 = vld [vmem:[#allocation2 + $0x178] sm:$0xf]
    %v874 = vld [vmem:[#allocation2 + $0x17c] sm:$0xf]
    %v875 = vunpack.c.l.bf16 %v859
    %v876 = vunpack.c.l.bf16 %v860
    %v877 = vunpack.c.l.bf16 %v861
    %v878 = vunpack.c.l.bf16 %v862
    %v879 = vunpack.c.l.bf16 %v863
    %v880 = vunpack.c.l.bf16 %v864
    %v881 = vunpack.c.l.bf16 %v865
    %v882 = vunpack.c.l.bf16 %v866
    %v883 = vunpack.c.l.bf16 %v867
    %v884 = vunpack.c.l.bf16 %v868
    %v885 = vunpack.c.l.bf16 %v869
    %v886 = vunpack.c.l.bf16 %v870
    %v887 = vunpack.c.l.bf16 %v871
    %v888 = vunpack.c.l.bf16 %v872
    %v889 = vunpack.c.l.bf16 %v873
    %v890 = vunpack.c.l.bf16 %v874
    %v891 = vrot.slane %v819, 4
    %v892 = vrot.slane %v820, 4
    %v893 = vrot.slane %v821, 4
    %v894 = vrot.slane %v822, 4
    %v895 = vrot.slane %v823, 4
    %v896 = vrot.slane %v824, 4
    %v897 = vrot.slane %v825, 4
    %v898 = vrot.slane %v826, 4
    %vm899 = vcmp.lt.s32.totalorder %v27, 4
    %v900 = vsel %vm899, %v897, %v898
    %v901 = vsel %vm899, %v896, %v897
    %v902 = vsel %vm899, %v895, %v896
    %v903 = vsel %vm899, %v894, %v895
    %v904 = vsel %vm899, %v893, %v894
    %v905 = vsel %vm899, %v892, %v893
    %v906 = vsel %vm899, %v891, %v892
    %v907 = vsel %vm899, %v898, %v891
    %vm908 = vcmp.ge.s32.totalorder %v123, 4
    %vm909 = vcmp.ge.s32.totalorder %v124, 4
    %vm910 = vcmp.ge.s32.totalorder %v125, 4
    %vm911 = vcmp.ge.s32.totalorder %v126, 4
    %vm912 = vcmp.ge.s32.totalorder %v127, 4
    %vm913 = vcmp.ge.s32.totalorder %v128, 4
    %vm914 = vcmp.ge.s32.totalorder %v129, 4
    %vm915 = vcmp.ge.s32.totalorder %v130, 4
    %v916 = vsel %vm908, %v907, 0.0
    %v917 = vsel %vm909, %v906, 0.0
    %v918 = vsel %vm910, %v905, 0.0
    %v919 = vsel %vm911, %v904, 0.0
    %v920 = vsel %vm912, %v903, 0.0
    %v921 = vsel %vm913, %v902, 0.0
    %v922 = vsel %vm914, %v901, 0.0
    %v923 = vsel %vm915, %v900, 0.0
    %924 = vmatprep.subr.mxu0 0.0
    %925 = vmatpush1.msra.mxu0 %v875
    %926 = vmatprep.subr.mxu0 0.0
    %927 = vmatpush1.msra.mxu0 %v876
    %928 = vmatprep.subr.mxu0 0.0
    %929 = vmatpush1.msra.mxu0 %v877
    %930 = vmatprep.subr.mxu0 0.0
    %931 = vmatpush1.msra.mxu0 %v878
    %932 = vmatprep.subr.mxu0 0.0
    %933 = vmatpush1.msra.mxu0 %v879
    %934 = vmatprep.subr.mxu0 0.0
    %935 = vmatpush1.msra.mxu0 %v880
    %936 = vmatprep.subr.mxu0 0.0
    %937 = vmatpush1.msra.mxu0 %v881
    %938 = vmatprep.subr.mxu0 0.0
    %939 = vmatpush1.msra.mxu0 %v882
    %940 = vmatprep.subr.mxu0 0.0
    %941 = vmatpush1.msra.mxu0 %v883
    %942 = vmatprep.subr.mxu0 0.0
    %943 = vmatpush1.msra.mxu0 %v884
    %944 = vmatprep.subr.mxu0 0.0
    %945 = vmatpush1.msra.mxu0 %v885
    %946 = vmatprep.subr.mxu0 0.0
    %947 = vmatpush1.msra.mxu0 %v886
    %948 = vmatprep.subr.mxu0 0.0
    %949 = vmatpush1.msra.mxu0 %v887
    %950 = vmatprep.subr.mxu0 0.0
    %951 = vmatpush1.msra.mxu0 %v888
    %952 = vmatprep.subr.mxu0 0.0
    %953 = vmatpush1.msra.mxu0 %v889
    %954 = vmatprep.subr.mxu0 0.0
    %955 = vmatpush1.msra.mxu0 %v890
    %956 = vmatprep.subr.mxu0 0.0
    %957 = vmatpush1.msra.mxu0 0.0
    %958 = vmatprep.subr.mxu0 0.0
    %959 = vmatpush1.msra.mxu0 0.0
    %960 = vmatprep.subr.mxu0 0.0
    %961 = vmatpush1.msra.mxu0 0.0
    %962 = vmatprep.subr.mxu0 0.0
    %963 = vmatpush1.msra.mxu0 0.0
    %964 = vmatprep.subr.mxu0 0.0
    %965 = vmatpush1.msra.mxu0 0.0
    %966 = vmatprep.subr.mxu0 0.0
    %967 = vmatpush1.msra.mxu0 0.0
    %968 = vmatprep.subr.mxu0 0.0
    %969 = vmatpush1.msra.mxu0 0.0
    %970 = vmatprep.subr.mxu0 0.0
    %971 = vmatpush1.msra.mxu0 0.0
    %972 = vmatprep.subr.mxu0 0.0
    %973 = vmatpush1.msra.mxu0 0.0
    %974 = vmatprep.subr.mxu0 0.0
    %975 = vmatpush1.msra.mxu0 0.0
    %976 = vmatprep.subr.mxu0 0.0
    %977 = vmatpush1.msra.mxu0 0.0
    %978 = vmatprep.subr.mxu0 0.0
    %979 = vmatpush1.msra.mxu0 0.0
    %980 = vmatprep.subr.mxu0 0.0
    %981 = vmatpush1.msra.mxu0 0.0
    %982 = vmatprep.subr.mxu0 0.0
    %983 = vmatpush1.msra.mxu0 0.0
    %984 = vmatprep.subr.mxu0 0.0
    %985 = vmatpush1.msra.mxu0 0.0
    %986 = vmatprep.subr.mxu0 0.0
    %987 = vmatpush1.msra.mxu0 0.0
    %988 = vmatprep.mubr.f32.mxu0 0.0
    %989 = vmatmul.mubr.f32.gmra.mrb[0].mxu0 %v819
    %v990 = vpop.f32.mrb[0].mxu0
    %v991 = vadd.f32 0.0, %v990
    %v992 = vpop.f32.mrb[0].mxu0
    %993 = vmatprep.mubr.f32.mxu0 0.0
    %994 = vmatmul.mubr.f32.gmra.mrb[0].mxu0 %v820
    %v995 = vpop.f32.mrb[0].mxu0
    %v996 = vadd.f32 0.0, %v995
    %v997 = vpop.f32.mrb[0].mxu0
    %998 = vmatprep.mubr.f32.mxu0 0.0
    %999 = vmatmul.mubr.f32.gmra.mrb[0].mxu0 %v821
    %v1000 = vpop.f32.mrb[0].mxu0
    %v1001 = vadd.f32 0.0, %v1000
    %v1002 = vpop.f32.mrb[0].mxu0
    %1003 = vmatprep.mubr.f32.mxu0 0.0
    %1004 = vmatmul.mubr.f32.gmra.mrb[0].mxu0 %v822
    %v1005 = vpop.f32.mrb[0].mxu0
    %v1006 = vadd.f32 0.0, %v1005
    %v1007 = vpop.f32.mrb[0].mxu0
    %1008 = vmatprep.mubr.f32.mxu0 0.0
    %1009 = vmatmul.mubr.f32.gmra.mrb[0].mxu0 %v823
    %v1010 = vpop.f32.mrb[0].mxu0
    %v1011 = vadd.f32 0.0, %v1010
    %v1012 = vpop.f32.mrb[0].mxu0
    %1013 = vmatprep.mubr.f32.mxu0 0.0
    %1014 = vmatmul.mubr.f32.gmra.mrb[0].mxu0 %v824
    %v1015 = vpop.f32.mrb[0].mxu0
    %v1016 = vadd.f32 0.0, %v1015
    %v1017 = vpop.f32.mrb[0].mxu0
    %1018 = vmatprep.mubr.f32.mxu0 0.0
    %1019 = vmatmul.mubr.f32.gmra.mrb[0].mxu0 %v825
    %v1020 = vpop.f32.mrb[0].mxu0
    %v1021 = vadd.f32 0.0, %v1020
    %v1022 = vpop.f32.mrb[0].mxu0
    %1023 = vmatprep.mubr.f32.mxu0 0.0
    %1024 = vmatmul.mubr.f32.gmra.mrb[0].mxu0 %v826
    %v1025 = vpop.f32.mrb[0].mxu0
    %v1026 = vadd.f32 0.0, %v1025
    %v1027 = vpop.f32.mrb[0].mxu0
    %1028 = vdwg.mxu0
    %1029 = vmatprep.subr.mxu0 0.0
    %1030 = vmatpush1.msra.mxu0 %v843
    %1031 = vmatprep.subr.mxu0 0.0
    %1032 = vmatpush1.msra.mxu0 %v844
    %1033 = vmatprep.subr.mxu0 0.0
    %1034 = vmatpush1.msra.mxu0 %v845
    %1035 = vmatprep.subr.mxu0 0.0
    %1036 = vmatpush1.msra.mxu0 %v846
    %1037 = vmatprep.subr.mxu0 0.0
    %1038 = vmatpush1.msra.mxu0 %v847
    %1039 = vmatprep.subr.mxu0 0.0
    %1040 = vmatpush1.msra.mxu0 %v848
    %1041 = vmatprep.subr.mxu0 0.0
    %1042 = vmatpush1.msra.mxu0 %v849
    %1043 = vmatprep.subr.mxu0 0.0
    %1044 = vmatpush1.msra.mxu0 %v850
    %1045 = vmatprep.subr.mxu0 0.0
    %1046 = vmatpush1.msra.mxu0 %v851
    %1047 = vmatprep.subr.mxu0 0.0
    %1048 = vmatpush1.msra.mxu0 %v852
    %1049 = vmatprep.subr.mxu0 0.0
    %1050 = vmatpush1.msra.mxu0 %v853
    %1051 = vmatprep.subr.mxu0 0.0
    %1052 = vmatpush1.msra.mxu0 %v854
    %1053 = vmatprep.subr.mxu0 0.0
    %1054 = vmatpush1.msra.mxu0 %v855
    %1055 = vmatprep.subr.mxu0 0.0
    %1056 = vmatpush1.msra.mxu0 %v856
    %1057 = vmatprep.subr.mxu0 0.0
    %1058 = vmatpush1.msra.mxu0 %v857
    %1059 = vmatprep.subr.mxu0 0.0
    %1060 = vmatpush1.msra.mxu0 %v858
    %1061 = vmatprep.subr.mxu0 0.0
    %1062 = vmatpush1.msra.mxu0 0.0
    %1063 = vmatprep.subr.mxu0 0.0
    %1064 = vmatpush1.msra.mxu0 0.0
    %1065 = vmatprep.subr.mxu0 0.0
    %1066 = vmatpush1.msra.mxu0 0.0
    %1067 = vmatprep.subr.mxu0 0.0
    %1068 = vmatpush1.msra.mxu0 0.0
    %1069 = vmatprep.subr.mxu0 0.0
    %1070 = vmatpush1.msra.mxu0 0.0
    %1071 = vmatprep.subr.mxu0 0.0
    %1072 = vmatpush1.msra.mxu0 0.0
    %1073 = vmatprep.subr.mxu0 0.0
    %1074 = vmatpush1.msra.mxu0 0.0
    %1075 = vmatprep.subr.mxu0 0.0
    %1076 = vmatpush1.msra.mxu0 0.0
    %1077 = vmatprep.subr.mxu0 0.0
    %1078 = vmatpush1.msra.mxu0 0.0
    %1079 = vmatprep.subr.mxu0 0.0
    %1080 = vmatpush1.msra.mxu0 0.0
    %1081 = vmatprep.subr.mxu0 0.0
    %1082 = vmatpush1.msra.mxu0 0.0
    %1083 = vmatprep.subr.mxu0 0.0
    %1084 = vmatpush1.msra.mxu0 0.0
    %1085 = vmatprep.subr.mxu0 0.0
    %1086 = vmatpush1.msra.mxu0 0.0
    %1087 = vmatprep.subr.mxu0 0.0
    %1088 = vmatpush1.msra.mxu0 0.0
    %1089 = vmatprep.subr.mxu0 0.0
    %1090 = vmatpush1.msra.mxu0 0.0
    %1091 = vmatprep.subr.mxu0 0.0
    %1092 = vmatpush1.msra.mxu0 0.0
    %1093 = vmatprep.mubr.f32.mxu0 0.0
    %1094 = vmatmul.mubr.f32.gmra.mrb[0].mxu0 %v916
    %v1095 = vpop.f32.mrb[0].mxu0
    %v1096 = vadd.f32 %v991, %v1095
    %v1097 = vpop.f32.mrb[0].mxu0
    %1098 = vmatprep.mubr.f32.mxu0 0.0
    %1099 = vmatmul.mubr.f32.gmra.mrb[0].mxu0 %v917
    %v1100 = vpop.f32.mrb[0].mxu0
    %v1101 = vadd.f32 %v996, %v1100
    %v1102 = vpop.f32.mrb[0].mxu0
    %1103 = vmatprep.mubr.f32.mxu0 0.0
    %1104 = vmatmul.mubr.f32.gmra.mrb[0].mxu0 %v918
    %v1105 = vpop.f32.mrb[0].mxu0
    %v1106 = vadd.f32 %v1001, %v1105
    %v1107 = vpop.f32.mrb[0].mxu0
    %1108 = vmatprep.mubr.f32.mxu0 0.0
    %1109 = vmatmul.mubr.f32.gmra.mrb[0].mxu0 %v919
    %v1110 = vpop.f32.mrb[0].mxu0
    %v1111 = vadd.f32 %v1006, %v1110
    %v1112 = vpop.f32.mrb[0].mxu0
    %1113 = vmatprep.mubr.f32.mxu0 0.0
    %1114 = vmatmul.mubr.f32.gmra.mrb[0].mxu0 %v920
    %v1115 = vpop.f32.mrb[0].mxu0
    %v1116 = vadd.f32 %v1011, %v1115
    %v1117 = vpop.f32.mrb[0].mxu0
    %1118 = vmatprep.mubr.f32.mxu0 0.0
    %1119 = vmatmul.mubr.f32.gmra.mrb[0].mxu0 %v921
    %v1120 = vpop.f32.mrb[0].mxu0
    %v1121 = vadd.f32 %v1016, %v1120
    %v1122 = vpop.f32.mrb[0].mxu0
    %1123 = vmatprep.mubr.f32.mxu0 0.0
    %1124 = vmatmul.mubr.f32.gmra.mrb[0].mxu0 %v922
    %v1125 = vpop.f32.mrb[0].mxu0
    %v1126 = vadd.f32 %v1021, %v1125
    %v1127 = vpop.f32.mrb[0].mxu0
    %1128 = vmatprep.mubr.f32.mxu0 0.0
    %1129 = vmatmul.mubr.f32.gmra.mrb[0].mxu0 %v923
    %v1130 = vpop.f32.mrb[0].mxu0
    %v1131 = vadd.f32 %v1026, %v1130
    %v1132 = vpop.f32.mrb[0].mxu0
    %1133 = vdwg.mxu0
    %v1134 = vlaneseq
    %v1135 = vshrl.u32 %v1134, 7
    %v1136 = vsub.s32 2, %v1135
    %v1137 = vrot.slane %v132, %v1136
    %v1138 = vadd.f32 %v1096, %v1137
    %v1139 = vadd.f32 %v1101, %v1137
    %v1140 = vadd.f32 %v1106, %v1137
    %v1141 = vadd.f32 %v1111, %v1137
    %v1142 = vadd.f32 %v1116, %v1137
    %v1143 = vadd.f32 %v1121, %v1137
    %v1144 = vadd.f32 %v1126, %v1137
    %v1145 = vadd.f32 %v1131, %v1137
    %vm1146 = vcmp.gt.f32.partialorder %v1138, 0.0
    %vm1147 = vcmp.gt.f32.partialorder %v1139, 0.0
    %vm1148 = vcmp.gt.f32.partialorder %v1140, 0.0
    %vm1149 = vcmp.gt.f32.partialorder %v1141, 0.0
    %vm1150 = vcmp.gt.f32.partialorder %v1142, 0.0
    %vm1151 = vcmp.gt.f32.partialorder %v1143, 0.0
    %vm1152 = vcmp.gt.f32.partialorder %v1144, 0.0
    %vm1153 = vcmp.gt.f32.partialorder %v1145, 0.0
    %v1154 = vmul.f32 %v1138, 0.1
    %v1155 = vmul.f32 %v1139, 0.1
    %v1156 = vmul.f32 %v1140, 0.1
    %v1157 = vmul.f32 %v1141, 0.1
    %v1158 = vmul.f32 %v1142, 0.1
    %v1159 = vmul.f32 %v1143, 0.1
    %v1160 = vmul.f32 %v1144, 0.1
    %v1161 = vmul.f32 %v1145, 0.1
    %v1162 = vsel %vm1146, %v1138, %v1154
    %v1163 = vsel %vm1147, %v1139, %v1155
    %v1164 = vsel %vm1148, %v1140, %v1156
    %v1165 = vsel %vm1149, %v1141, %v1157
    %v1166 = vsel %vm1150, %v1142, %v1158
    %v1167 = vsel %vm1151, %v1143, %v1159
    %v1168 = vsel %vm1152, %v1144, %v1160
    %v1169 = vsel %vm1153, %v1145, %v1161
    %v1170 = vld [vmem:[#allocation2 + $0x180] sm:$0xf]
    %v1171 = vld [vmem:[#allocation2 + $0x184] sm:$0xf]
    %v1172 = vld [vmem:[#allocation2 + $0x188] sm:$0xf]
    %v1173 = vld [vmem:[#allocation2 + $0x18c] sm:$0xf]
    %v1174 = vld [vmem:[#allocation2 + $0x190] sm:$0xf]
    %v1175 = vld [vmem:[#allocation2 + $0x194] sm:$0xf]
    %v1176 = vld [vmem:[#allocation2 + $0x198] sm:$0xf]
    %v1177 = vld [vmem:[#allocation2 + $0x19c] sm:$0xf]
    %v1178 = vld [vmem:[#allocation2 + $0x1a0] sm:$0xf]
    %v1179 = vld [vmem:[#allocation2 + $0x1a4] sm:$0xf]
    %v1180 = vld [vmem:[#allocation2 + $0x1a8] sm:$0xf]
    %v1181 = vld [vmem:[#allocation2 + $0x1ac] sm:$0xf]
    %v1182 = vld [vmem:[#allocation2 + $0x1b0] sm:$0xf]
    %v1183 = vld [vmem:[#allocation2 + $0x1b4] sm:$0xf]
    %v1184 = vld [vmem:[#allocation2 + $0x1b8] sm:$0xf]
    %v1185 = vld [vmem:[#allocation2 + $0x1bc] sm:$0xf]
    %v1186 = vunpack.c.l.bf16 %v1170
    %v1187 = vunpack.c.l.bf16 %v1171
    %v1188 = vunpack.c.l.bf16 %v1172
    %v1189 = vunpack.c.l.bf16 %v1173
    %v1190 = vunpack.c.l.bf16 %v1174
    %v1191 = vunpack.c.l.bf16 %v1175
    %v1192 = vunpack.c.l.bf16 %v1176
    %v1193 = vunpack.c.l.bf16 %v1177
    %v1194 = vunpack.c.l.bf16 %v1178
    %v1195 = vunpack.c.l.bf16 %v1179
    %v1196 = vunpack.c.l.bf16 %v1180
    %v1197 = vunpack.c.l.bf16 %v1181
    %v1198 = vunpack.c.l.bf16 %v1182
    %v1199 = vunpack.c.l.bf16 %v1183
    %v1200 = vunpack.c.l.bf16 %v1184
    %v1201 = vunpack.c.l.bf16 %v1185
    %v1202 = vld [vmem:[#allocation2 + $0x1c0] sm:$0xf]
    %v1203 = vld [vmem:[#allocation2 + $0x1c4] sm:$0xf]
    %v1204 = vld [vmem:[#allocation2 + $0x1c8] sm:$0xf]
    %v1205 = vld [vmem:[#allocation2 + $0x1cc] sm:$0xf]
    %v1206 = vld [vmem:[#allocation2 + $0x1d0] sm:$0xf]
    %v1207 = vld [vmem:[#allocation2 + $0x1d4] sm:$0xf]
    %v1208 = vld [vmem:[#allocation2 + $0x1d8] sm:$0xf]
    %v1209 = vld [vmem:[#allocation2 + $0x1dc] sm:$0xf]
    %v1210 = vld [vmem:[#allocation2 + $0x1e0] sm:$0xf]
    %v1211 = vld [vmem:[#allocation2 + $0x1e4] sm:$0xf]
    %v1212 = vld [vmem:[#allocation2 + $0x1e8] sm:$0xf]
    %v1213 = vld [vmem:[#allocation2 + $0x1ec] sm:$0xf]
    %v1214 = vld [vmem:[#allocation2 + $0x1f0] sm:$0xf]
    %v1215 = vld [vmem:[#allocation2 + $0x1f4] sm:$0xf]
    %v1216 = vld [vmem:[#allocation2 + $0x1f8] sm:$0xf]
    %v1217 = vld [vmem:[#allocation2 + $0x1fc] sm:$0xf]
    %v1218 = vunpack.c.l.bf16 %v1202
    %v1219 = vunpack.c.l.bf16 %v1203
    %v1220 = vunpack.c.l.bf16 %v1204
    %v1221 = vunpack.c.l.bf16 %v1205
    %v1222 = vunpack.c.l.bf16 %v1206
    %v1223 = vunpack.c.l.bf16 %v1207
    %v1224 = vunpack.c.l.bf16 %v1208
    %v1225 = vunpack.c.l.bf16 %v1209
    %v1226 = vunpack.c.l.bf16 %v1210
    %v1227 = vunpack.c.l.bf16 %v1211
    %v1228 = vunpack.c.l.bf16 %v1212
    %v1229 = vunpack.c.l.bf16 %v1213
    %v1230 = vunpack.c.l.bf16 %v1214
    %v1231 = vunpack.c.l.bf16 %v1215
    %v1232 = vunpack.c.l.bf16 %v1216
    %v1233 = vunpack.c.l.bf16 %v1217
    %vm1234 = vcmp.ge.s32.totalorder %v123, 8
    %vm1235 = vcmp.ge.s32.totalorder %v124, 8
    %vm1236 = vcmp.ge.s32.totalorder %v125, 8
    %vm1237 = vcmp.ge.s32.totalorder %v126, 8
    %vm1238 = vcmp.ge.s32.totalorder %v127, 8
    %vm1239 = vcmp.ge.s32.totalorder %v128, 8
    %vm1240 = vcmp.ge.s32.totalorder %v129, 8
    %vm1241 = vcmp.ge.s32.totalorder %v130, 8
    %v1242 = vsel %vm1234, %v1169, 0.0
    %v1243 = vsel %vm1235, %v1162, 0.0
    %v1244 = vsel %vm1236, %v1163, 0.0
    %v1245 = vsel %vm1237, %v1164, 0.0
    %v1246 = vsel %vm1238, %v1165, 0.0
    %v1247 = vsel %vm1239, %v1166, 0.0
    %v1248 = vsel %vm1240, %v1167, 0.0
    %v1249 = vsel %vm1241, %v1168, 0.0
    %1250 = vmatprep.subr.mxu0 0.0
    %1251 = vmatpush1.msra.mxu0 %v1218
    %1252 = vmatprep.subr.mxu0 0.0
    %1253 = vmatpush1.msra.mxu0 %v1219
    %1254 = vmatprep.subr.mxu0 0.0
    %1255 = vmatpush1.msra.mxu0 %v1220
    %1256 = vmatprep.subr.mxu0 0.0
    %1257 = vmatpush1.msra.mxu0 %v1221
    %1258 = vmatprep.subr.mxu0 0.0
    %1259 = vmatpush1.msra.mxu0 %v1222
    %1260 = vmatprep.subr.mxu0 0.0
    %1261 = vmatpush1.msra.mxu0 %v1223
    %1262 = vmatprep.subr.mxu0 0.0
    %1263 = vmatpush1.msra.mxu0 %v1224
    %1264 = vmatprep.subr.mxu0 0.0
    %1265 = vmatpush1.msra.mxu0 %v1225
    %1266 = vmatprep.subr.mxu0 0.0
    %1267 = vmatpush1.msra.mxu0 %v1226
    %1268 = vmatprep.subr.mxu0 0.0
    %1269 = vmatpush1.msra.mxu0 %v1227
    %1270 = vmatprep.subr.mxu0 0.0
    %1271 = vmatpush1.msra.mxu0 %v1228
    %1272 = vmatprep.subr.mxu0 0.0
    %1273 = vmatpush1.msra.mxu0 %v1229
    %1274 = vmatprep.subr.mxu0 0.0
    %1275 = vmatpush1.msra.mxu0 %v1230
    %1276 = vmatprep.subr.mxu0 0.0
    %1277 = vmatpush1.msra.mxu0 %v1231
    %1278 = vmatprep.subr.mxu0 0.0
    %1279 = vmatpush1.msra.mxu0 %v1232
    %1280 = vmatprep.subr.mxu0 0.0
    %1281 = vmatpush1.msra.mxu0 %v1233
    %1282 = vmatprep.subr.mxu0 0.0
    %1283 = vmatpush1.msra.mxu0 0.0
    %1284 = vmatprep.subr.mxu0 0.0
    %1285 = vmatpush1.msra.mxu0 0.0
    %1286 = vmatprep.subr.mxu0 0.0
    %1287 = vmatpush1.msra.mxu0 0.0
    %1288 = vmatprep.subr.mxu0 0.0
    %1289 = vmatpush1.msra.mxu0 0.0
    %1290 = vmatprep.subr.mxu0 0.0
    %1291 = vmatpush1.msra.mxu0 0.0
    %1292 = vmatprep.subr.mxu0 0.0
    %1293 = vmatpush1.msra.mxu0 0.0
    %1294 = vmatprep.subr.mxu0 0.0
    %1295 = vmatpush1.msra.mxu0 0.0
    %1296 = vmatprep.subr.mxu0 0.0
    %1297 = vmatpush1.msra.mxu0 0.0
    %1298 = vmatprep.subr.mxu0 0.0
    %1299 = vmatpush1.msra.mxu0 0.0
    %1300 = vmatprep.subr.mxu0 0.0
    %1301 = vmatpush1.msra.mxu0 0.0
    %1302 = vmatprep.subr.mxu0 0.0
    %1303 = vmatpush1.msra.mxu0 0.0
    %1304 = vmatprep.subr.mxu0 0.0
    %1305 = vmatpush1.msra.mxu0 0.0
    %1306 = vmatprep.subr.mxu0 0.0
    %1307 = vmatpush1.msra.mxu0 0.0
    %1308 = vmatprep.subr.mxu0 0.0
    %1309 = vmatpush1.msra.mxu0 0.0
    %1310 = vmatprep.subr.mxu0 0.0
    %1311 = vmatpush1.msra.mxu0 0.0
    %1312 = vmatprep.subr.mxu0 0.0
    %1313 = vmatpush1.msra.mxu0 0.0
    %1314 = vmatprep.mubr.f32.mxu0 0.0
    %1315 = vmatmul.mubr.f32.gmra.mrb[0].mxu0 %v1162
    %v1316 = vpop.f32.mrb[0].mxu0
    %v1317 = vadd.f32 0.0, %v1316
    %v1318 = vpop.f32.mrb[0].mxu0
    %1319 = vmatprep.mubr.f32.mxu0 0.0
    %1320 = vmatmul.mubr.f32.gmra.mrb[0].mxu0 %v1163
    %v1321 = vpop.f32.mrb[0].mxu0
    %v1322 = vadd.f32 0.0, %v1321
    %v1323 = vpop.f32.mrb[0].mxu0
    %1324 = vmatprep.mubr.f32.mxu0 0.0
    %1325 = vmatmul.mubr.f32.gmra.mrb[0].mxu0 %v1164
    %v1326 = vpop.f32.mrb[0].mxu0
    %v1327 = vadd.f32 0.0, %v1326
    %v1328 = vpop.f32.mrb[0].mxu0
    %1329 = vmatprep.mubr.f32.mxu0 0.0
    %1330 = vmatmul.mubr.f32.gmra.mrb[0].mxu0 %v1165
    %v1331 = vpop.f32.mrb[0].mxu0
    %v1332 = vadd.f32 0.0, %v1331
    %v1333 = vpop.f32.mrb[0].mxu0
    %1334 = vmatprep.mubr.f32.mxu0 0.0
    %1335 = vmatmul.mubr.f32.gmra.mrb[0].mxu0 %v1166
    %v1336 = vpop.f32.mrb[0].mxu0
    %v1337 = vadd.f32 0.0, %v1336
    %v1338 = vpop.f32.mrb[0].mxu0
    %1339 = vmatprep.mubr.f32.mxu0 0.0
    %1340 = vmatmul.mubr.f32.gmra.mrb[0].mxu0 %v1167
    %v1341 = vpop.f32.mrb[0].mxu0
    %v1342 = vadd.f32 0.0, %v1341
    %v1343 = vpop.f32.mrb[0].mxu0
    %1344 = vmatprep.mubr.f32.mxu0 0.0
    %1345 = vmatmul.mubr.f32.gmra.mrb[0].mxu0 %v1168
    %v1346 = vpop.f32.mrb[0].mxu0
    %v1347 = vadd.f32 0.0, %v1346
    %v1348 = vpop.f32.mrb[0].mxu0
    %1349 = vmatprep.mubr.f32.mxu0 0.0
    %1350 = vmatmul.mubr.f32.gmra.mrb[0].mxu0 %v1169
    %v1351 = vpop.f32.mrb[0].mxu0
    %v1352 = vadd.f32 0.0, %v1351
    %v1353 = vpop.f32.mrb[0].mxu0
    %1354 = vdwg.mxu0
    %1355 = vmatprep.subr.mxu0 0.0
    %1356 = vmatpush1.msra.mxu0 %v1186
    %1357 = vmatprep.subr.mxu0 0.0
    %1358 = vmatpush1.msra.mxu0 %v1187
    %1359 = vmatprep.subr.mxu0 0.0
    %1360 = vmatpush1.msra.mxu0 %v1188
    %1361 = vmatprep.subr.mxu0 0.0
    %1362 = vmatpush1.msra.mxu0 %v1189
    %1363 = vmatprep.subr.mxu0 0.0
    %1364 = vmatpush1.msra.mxu0 %v1190
    %1365 = vmatprep.subr.mxu0 0.0
    %1366 = vmatpush1.msra.mxu0 %v1191
    %1367 = vmatprep.subr.mxu0 0.0
    %1368 = vmatpush1.msra.mxu0 %v1192
    %1369 = vmatprep.subr.mxu0 0.0
    %1370 = vmatpush1.msra.mxu0 %v1193
    %1371 = vmatprep.subr.mxu0 0.0
    %1372 = vmatpush1.msra.mxu0 %v1194
    %1373 = vmatprep.subr.mxu0 0.0
    %1374 = vmatpush1.msra.mxu0 %v1195
    %1375 = vmatprep.subr.mxu0 0.0
    %1376 = vmatpush1.msra.mxu0 %v1196
    %1377 = vmatprep.subr.mxu0 0.0
    %1378 = vmatpush1.msra.mxu0 %v1197
    %1379 = vmatprep.subr.mxu0 0.0
    %1380 = vmatpush1.msra.mxu0 %v1198
    %1381 = vmatprep.subr.mxu0 0.0
    %1382 = vmatpush1.msra.mxu0 %v1199
    %1383 = vmatprep.subr.mxu0 0.0
    %1384 = vmatpush1.msra.mxu0 %v1200
    %1385 = vmatprep.subr.mxu0 0.0
    %1386 = vmatpush1.msra.mxu0 %v1201
    %1387 = vmatprep.subr.mxu0 0.0
    %1388 = vmatpush1.msra.mxu0 0.0
    %1389 = vmatprep.subr.mxu0 0.0
    %1390 = vmatpush1.msra.mxu0 0.0
    %1391 = vmatprep.subr.mxu0 0.0
    %1392 = vmatpush1.msra.mxu0 0.0
    %1393 = vmatprep.subr.mxu0 0.0
    %1394 = vmatpush1.msra.mxu0 0.0
    %1395 = vmatprep.subr.mxu0 0.0
    %1396 = vmatpush1.msra.mxu0 0.0
    %1397 = vmatprep.subr.mxu0 0.0
    %1398 = vmatpush1.msra.mxu0 0.0
    %1399 = vmatprep.subr.mxu0 0.0
    %1400 = vmatpush1.msra.mxu0 0.0
    %1401 = vmatprep.subr.mxu0 0.0
    %1402 = vmatpush1.msra.mxu0 0.0
    %1403 = vmatprep.subr.mxu0 0.0
    %1404 = vmatpush1.msra.mxu0 0.0
    %1405 = vmatprep.subr.mxu0 0.0
    %1406 = vmatpush1.msra.mxu0 0.0
    %1407 = vmatprep.subr.mxu0 0.0
    %1408 = vmatpush1.msra.mxu0 0.0
    %1409 = vmatprep.subr.mxu0 0.0
    %1410 = vmatpush1.msra.mxu0 0.0
    %1411 = vmatprep.subr.mxu0 0.0
    %1412 = vmatpush1.msra.mxu0 0.0
    %1413 = vmatprep.subr.mxu0 0.0
    %1414 = vmatpush1.msra.mxu0 0.0
    %1415 = vmatprep.subr.mxu0 0.0
    %1416 = vmatpush1.msra.mxu0 0.0
    %1417 = vmatprep.subr.mxu0 0.0
    %1418 = vmatpush1.msra.mxu0 0.0
    %1419 = vmatprep.mubr.f32.mxu0 0.0
    %1420 = vmatmul.mubr.f32.gmra.mrb[0].mxu0 %v1242
    %v1421 = vpop.f32.mrb[0].mxu0
    %v1422 = vadd.f32 %v1317, %v1421
    %v1423 = vpop.f32.mrb[0].mxu0
    %1424 = vmatprep.mubr.f32.mxu0 0.0
    %1425 = vmatmul.mubr.f32.gmra.mrb[0].mxu0 %v1243
    %v1426 = vpop.f32.mrb[0].mxu0
    %v1427 = vadd.f32 %v1322, %v1426
    %v1428 = vpop.f32.mrb[0].mxu0
    %1429 = vmatprep.mubr.f32.mxu0 0.0
    %1430 = vmatmul.mubr.f32.gmra.mrb[0].mxu0 %v1244
    %v1431 = vpop.f32.mrb[0].mxu0
    %v1432 = vadd.f32 %v1327, %v1431
    %v1433 = vpop.f32.mrb[0].mxu0
    %1434 = vmatprep.mubr.f32.mxu0 0.0
    %1435 = vmatmul.mubr.f32.gmra.mrb[0].mxu0 %v1245
    %v1436 = vpop.f32.mrb[0].mxu0
    %v1437 = vadd.f32 %v1332, %v1436
    %v1438 = vpop.f32.mrb[0].mxu0
    %1439 = vmatprep.mubr.f32.mxu0 0.0
    %1440 = vmatmul.mubr.f32.gmra.mrb[0].mxu0 %v1246
    %v1441 = vpop.f32.mrb[0].mxu0
    %v1442 = vadd.f32 %v1337, %v1441
    %v1443 = vpop.f32.mrb[0].mxu0
    %1444 = vmatprep.mubr.f32.mxu0 0.0
    %1445 = vmatmul.mubr.f32.gmra.mrb[0].mxu0 %v1247
    %v1446 = vpop.f32.mrb[0].mxu0
    %v1447 = vadd.f32 %v1342, %v1446
    %v1448 = vpop.f32.mrb[0].mxu0
    %1449 = vmatprep.mubr.f32.mxu0 0.0
    %1450 = vmatmul.mubr.f32.gmra.mrb[0].mxu0 %v1248
    %v1451 = vpop.f32.mrb[0].mxu0
    %v1452 = vadd.f32 %v1347, %v1451
    %v1453 = vpop.f32.mrb[0].mxu0
    %1454 = vmatprep.mubr.f32.mxu0 0.0
    %1455 = vmatmul.mubr.f32.gmra.mrb[0].mxu0 %v1249
    %v1456 = vpop.f32.mrb[0].mxu0
    %v1457 = vadd.f32 %v1352, %v1456
    %v1458 = vpop.f32.mrb[0].mxu0
    %1459 = vdwg.mxu0
    %v1460 = vlaneseq
    %v1461 = vshrl.u32 %v1460, 7
    %v1462 = vsub.s32 3, %v1461
    %v1463 = vrot.slane %v132, %v1462
    %v1464 = vadd.f32 %v1422, %v1463
    %v1465 = vadd.f32 %v1427, %v1463
    %v1466 = vadd.f32 %v1432, %v1463
    %v1467 = vadd.f32 %v1437, %v1463
    %v1468 = vadd.f32 %v1442, %v1463
    %v1469 = vadd.f32 %v1447, %v1463
    %v1470 = vadd.f32 %v1452, %v1463
    %v1471 = vadd.f32 %v1457, %v1463
    %vm1472 = vcmp.gt.f32.partialorder %v1464, 0.0
    %vm1473 = vcmp.gt.f32.partialorder %v1465, 0.0
    %vm1474 = vcmp.gt.f32.partialorder %v1466, 0.0
    %vm1475 = vcmp.gt.f32.partialorder %v1467, 0.0
    %vm1476 = vcmp.gt.f32.partialorder %v1468, 0.0
    %vm1477 = vcmp.gt.f32.partialorder %v1469, 0.0
    %vm1478 = vcmp.gt.f32.partialorder %v1470, 0.0
    %vm1479 = vcmp.gt.f32.partialorder %v1471, 0.0
    %v1480 = vmul.f32 %v1464, 0.1
    %v1481 = vmul.f32 %v1465, 0.1
    %v1482 = vmul.f32 %v1466, 0.1
    %v1483 = vmul.f32 %v1467, 0.1
    %v1484 = vmul.f32 %v1468, 0.1
    %v1485 = vmul.f32 %v1469, 0.1
    %v1486 = vmul.f32 %v1470, 0.1
    %v1487 = vmul.f32 %v1471, 0.1
    %v1488 = vsel %vm1472, %v1464, %v1480
    %v1489 = vsel %vm1473, %v1465, %v1481
    %v1490 = vsel %vm1474, %v1466, %v1482
    %v1491 = vsel %vm1475, %v1467, %v1483
    %v1492 = vsel %vm1476, %v1468, %v1484
    %v1493 = vsel %vm1477, %v1469, %v1485
    %v1494 = vsel %vm1478, %v1470, %v1486
    %v1495 = vsel %vm1479, %v1471, %v1487
    %v1496 = vld [vmem:[#allocation2 + $0x200] sm:$0xf]
    %v1497 = vld [vmem:[#allocation2 + $0x204] sm:$0xf]
    %v1498 = vld [vmem:[#allocation2 + $0x208] sm:$0xf]
    %v1499 = vld [vmem:[#allocation2 + $0x20c] sm:$0xf]
    %v1500 = vld [vmem:[#allocation2 + $0x210] sm:$0xf]
    %v1501 = vld [vmem:[#allocation2 + $0x214] sm:$0xf]
    %v1502 = vld [vmem:[#allocation2 + $0x218] sm:$0xf]
    %v1503 = vld [vmem:[#allocation2 + $0x21c] sm:$0xf]
    %v1504 = vld [vmem:[#allocation2 + $0x220] sm:$0xf]
    %v1505 = vld [vmem:[#allocation2 + $0x224] sm:$0xf]
    %v1506 = vld [vmem:[#allocation2 + $0x228] sm:$0xf]
    %v1507 = vld [vmem:[#allocation2 + $0x22c] sm:$0xf]
    %v1508 = vld [vmem:[#allocation2 + $0x230] sm:$0xf]
    %v1509 = vld [vmem:[#allocation2 + $0x234] sm:$0xf]
    %v1510 = vld [vmem:[#allocation2 + $0x238] sm:$0xf]
    %v1511 = vld [vmem:[#allocation2 + $0x23c] sm:$0xf]
    %v1512 = vunpack.c.l.bf16 %v1496
    %v1513 = vunpack.c.l.bf16 %v1497
    %v1514 = vunpack.c.l.bf16 %v1498
    %v1515 = vunpack.c.l.bf16 %v1499
    %v1516 = vunpack.c.l.bf16 %v1500
    %v1517 = vunpack.c.l.bf16 %v1501
    %v1518 = vunpack.c.l.bf16 %v1502
    %v1519 = vunpack.c.l.bf16 %v1503
    %v1520 = vunpack.c.l.bf16 %v1504
    %v1521 = vunpack.c.l.bf16 %v1505
    %v1522 = vunpack.c.l.bf16 %v1506
    %v1523 = vunpack.c.l.bf16 %v1507
    %v1524 = vunpack.c.l.bf16 %v1508
    %v1525 = vunpack.c.l.bf16 %v1509
    %v1526 = vunpack.c.l.bf16 %v1510
    %v1527 = vunpack.c.l.bf16 %v1511
    %v1528 = vld [vmem:[#allocation2 + $0x240] sm:$0xf]
    %v1529 = vld [vmem:[#allocation2 + $0x244] sm:$0xf]
    %v1530 = vld [vmem:[#allocation2 + $0x248] sm:$0xf]
    %v1531 = vld [vmem:[#allocation2 + $0x24c] sm:$0xf]
    %v1532 = vld [vmem:[#allocation2 + $0x250] sm:$0xf]
    %v1533 = vld [vmem:[#allocation2 + $0x254] sm:$0xf]
    %v1534 = vld [vmem:[#allocation2 + $0x258] sm:$0xf]
    %v1535 = vld [vmem:[#allocation2 + $0x25c] sm:$0xf]
    %v1536 = vld [vmem:[#allocation2 + $0x260] sm:$0xf]
    %v1537 = vld [vmem:[#allocation2 + $0x264] sm:$0xf]
    %v1538 = vld [vmem:[#allocation2 + $0x268] sm:$0xf]
    %v1539 = vld [vmem:[#allocation2 + $0x26c] sm:$0xf]
    %v1540 = vld [vmem:[#allocation2 + $0x270] sm:$0xf]
    %v1541 = vld [vmem:[#allocation2 + $0x274] sm:$0xf]
    %v1542 = vld [vmem:[#allocation2 + $0x278] sm:$0xf]
    %v1543 = vld [vmem:[#allocation2 + $0x27c] sm:$0xf]
    %v1544 = vunpack.c.l.bf16 %v1528
    %v1545 = vunpack.c.l.bf16 %v1529
    %v1546 = vunpack.c.l.bf16 %v1530
    %v1547 = vunpack.c.l.bf16 %v1531
    %v1548 = vunpack.c.l.bf16 %v1532
    %v1549 = vunpack.c.l.bf16 %v1533
    %v1550 = vunpack.c.l.bf16 %v1534
    %v1551 = vunpack.c.l.bf16 %v1535
    %v1552 = vunpack.c.l.bf16 %v1536
    %v1553 = vunpack.c.l.bf16 %v1537
    %v1554 = vunpack.c.l.bf16 %v1538
    %v1555 = vunpack.c.l.bf16 %v1539
    %v1556 = vunpack.c.l.bf16 %v1540
    %v1557 = vunpack.c.l.bf16 %v1541
    %v1558 = vunpack.c.l.bf16 %v1542
    %v1559 = vunpack.c.l.bf16 %v1543
    %vm1560 = vcmp.ge.s32.totalorder %v123, 16
    %vm1561 = vcmp.ge.s32.totalorder %v124, 16
    %vm1562 = vcmp.ge.s32.totalorder %v125, 16
    %vm1563 = vcmp.ge.s32.totalorder %v126, 16
    %vm1564 = vcmp.ge.s32.totalorder %v127, 16
    %vm1565 = vcmp.ge.s32.totalorder %v128, 16
    %vm1566 = vcmp.ge.s32.totalorder %v129, 16
    %vm1567 = vcmp.ge.s32.totalorder %v130, 16
    %v1568 = vsel %vm1560, %v1494, 0.0
    %v1569 = vsel %vm1561, %v1495, 0.0
    %v1570 = vsel %vm1562, %v1488, 0.0
    %v1571 = vsel %vm1563, %v1489, 0.0
    %v1572 = vsel %vm1564, %v1490, 0.0
    %v1573 = vsel %vm1565, %v1491, 0.0
    %v1574 = vsel %vm1566, %v1492, 0.0
    %v1575 = vsel %vm1567, %v1493, 0.0
    %1576 = vmatprep.subr.mxu0 0.0
    %1577 = vmatpush1.msra.mxu0 %v1544
    %1578 = vmatprep.subr.mxu0 0.0
    %1579 = vmatpush1.msra.mxu0 %v1545
    %1580 = vmatprep.subr.mxu0 0.0
    %1581 = vmatpush1.msra.mxu0 %v1546
    %1582 = vmatprep.subr.mxu0 0.0
    %1583 = vmatpush1.msra.mxu0 %v1547
    %1584 = vmatprep.subr.mxu0 0.0
    %1585 = vmatpush1.msra.mxu0 %v1548
    %1586 = vmatprep.subr.mxu0 0.0
    %1587 = vmatpush1.msra.mxu0 %v1549
    %1588 = vmatprep.subr.mxu0 0.0
    %1589 = vmatpush1.msra.mxu0 %v1550
    %1590 = vmatprep.subr.mxu0 0.0
    %1591 = vmatpush1.msra.mxu0 %v1551
    %1592 = vmatprep.subr.mxu0 0.0
    %1593 = vmatpush1.msra.mxu0 %v1552
    %1594 = vmatprep.subr.mxu0 0.0
    %1595 = vmatpush1.msra.mxu0 %v1553
    %1596 = vmatprep.subr.mxu0 0.0
    %1597 = vmatpush1.msra.mxu0 %v1554
    %1598 = vmatprep.subr.mxu0 0.0
    %1599 = vmatpush1.msra.mxu0 %v1555
    %1600 = vmatprep.subr.mxu0 0.0
    %1601 = vmatpush1.msra.mxu0 %v1556
    %1602 = vmatprep.subr.mxu0 0.0
    %1603 = vmatpush1.msra.mxu0 %v1557
    %1604 = vmatprep.subr.mxu0 0.0
    %1605 = vmatpush1.msra.mxu0 %v1558
    %1606 = vmatprep.subr.mxu0 0.0
    %1607 = vmatpush1.msra.mxu0 %v1559
    %1608 = vmatprep.subr.mxu0 0.0
    %1609 = vmatpush1.msra.mxu0 0.0
    %1610 = vmatprep.subr.mxu0 0.0
    %1611 = vmatpush1.msra.mxu0 0.0
    %1612 = vmatprep.subr.mxu0 0.0
    %1613 = vmatpush1.msra.mxu0 0.0
    %1614 = vmatprep.subr.mxu0 0.0
    %1615 = vmatpush1.msra.mxu0 0.0
    %1616 = vmatprep.subr.mxu0 0.0
    %1617 = vmatpush1.msra.mxu0 0.0
    %1618 = vmatprep.subr.mxu0 0.0
    %1619 = vmatpush1.msra.mxu0 0.0
    %1620 = vmatprep.subr.mxu0 0.0
    %1621 = vmatpush1.msra.mxu0 0.0
    %1622 = vmatprep.subr.mxu0 0.0
    %1623 = vmatpush1.msra.mxu0 0.0
    %1624 = vmatprep.subr.mxu0 0.0
    %1625 = vmatpush1.msra.mxu0 0.0
    %1626 = vmatprep.subr.mxu0 0.0
    %1627 = vmatpush1.msra.mxu0 0.0
    %1628 = vmatprep.subr.mxu0 0.0
    %1629 = vmatpush1.msra.mxu0 0.0
    %1630 = vmatprep.subr.mxu0 0.0
    %1631 = vmatpush1.msra.mxu0 0.0
    %1632 = vmatprep.subr.mxu0 0.0
    %1633 = vmatpush1.msra.mxu0 0.0
    %1634 = vmatprep.subr.mxu0 0.0
    %1635 = vmatpush1.msra.mxu0 0.0
    %1636 = vmatprep.subr.mxu0 0.0
    %1637 = vmatpush1.msra.mxu0 0.0
    %1638 = vmatprep.subr.mxu0 0.0
    %1639 = vmatpush1.msra.mxu0 0.0
    %1640 = vmatprep.mubr.f32.mxu0 0.0
    %1641 = vmatmul.mubr.f32.gmra.mrb[0].mxu0 %v1488
    %v1642 = vpop.f32.mrb[0].mxu0
    %v1643 = vadd.f32 0.0, %v1642
    %v1644 = vpop.f32.mrb[0].mxu0
    %1645 = vmatprep.mubr.f32.mxu0 0.0
    %1646 = vmatmul.mubr.f32.gmra.mrb[0].mxu0 %v1489
    %v1647 = vpop.f32.mrb[0].mxu0
    %v1648 = vpop.f32.mrb[0].mxu0
    %1649 = vmatprep.mubr.f32.mxu0 0.0
    %1650 = vmatmul.mubr.f32.gmra.mrb[0].mxu0 %v1490
    %v1651 = vpop.f32.mrb[0].mxu0
    %v1652 = vpop.f32.mrb[0].mxu0
    %1653 = vmatprep.mubr.f32.mxu0 0.0
    %1654 = vmatmul.mubr.f32.gmra.mrb[0].mxu0 %v1491
    %v1655 = vpop.f32.mrb[0].mxu0
    %v1656 = vpop.f32.mrb[0].mxu0
    %1657 = vmatprep.mubr.f32.mxu0 0.0
    %1658 = vmatmul.mubr.f32.gmra.mrb[0].mxu0 %v1492
    %v1659 = vpop.f32.mrb[0].mxu0
    %v1660 = vadd.f32 0.0, %v1659
    %v1661 = vpop.f32.mrb[0].mxu0
    %1662 = vmatprep.mubr.f32.mxu0 0.0
    %1663 = vmatmul.mubr.f32.gmra.mrb[0].mxu0 %v1493
    %v1664 = vpop.f32.mrb[0].mxu0
    %v1665 = vpop.f32.mrb[0].mxu0
    %1666 = vmatprep.mubr.f32.mxu0 0.0
    %1667 = vmatmul.mubr.f32.gmra.mrb[0].mxu0 %v1494
    %v1668 = vpop.f32.mrb[0].mxu0
    %v1669 = vpop.f32.mrb[0].mxu0
    %1670 = vmatprep.mubr.f32.mxu0 0.0
    %1671 = vmatmul.mubr.f32.gmra.mrb[0].mxu0 %v1495
    %v1672 = vpop.f32.mrb[0].mxu0
    %v1673 = vpop.f32.mrb[0].mxu0
    %1674 = vdwg.mxu0
    %1675 = vmatprep.subr.mxu0 0.0
    %1676 = vmatpush1.msra.mxu0 %v1512
    %1677 = vmatprep.subr.mxu0 0.0
    %1678 = vmatpush1.msra.mxu0 %v1513
    %1679 = vmatprep.subr.mxu0 0.0
    %1680 = vmatpush1.msra.mxu0 %v1514
    %1681 = vmatprep.subr.mxu0 0.0
    %1682 = vmatpush1.msra.mxu0 %v1515
    %1683 = vmatprep.subr.mxu0 0.0
    %1684 = vmatpush1.msra.mxu0 %v1516
    %1685 = vmatprep.subr.mxu0 0.0
    %1686 = vmatpush1.msra.mxu0 %v1517
    %1687 = vmatprep.subr.mxu0 0.0
    %1688 = vmatpush1.msra.mxu0 %v1518
    %1689 = vmatprep.subr.mxu0 0.0
    %1690 = vmatpush1.msra.mxu0 %v1519
    %1691 = vmatprep.subr.mxu0 0.0
    %1692 = vmatpush1.msra.mxu0 %v1520
    %1693 = vmatprep.subr.mxu0 0.0
    %1694 = vmatpush1.msra.mxu0 %v1521
    %1695 = vmatprep.subr.mxu0 0.0
    %1696 = vmatpush1.msra.mxu0 %v1522
    %1697 = vmatprep.subr.mxu0 0.0
    %1698 = vmatpush1.msra.mxu0 %v1523
    %1699 = vmatprep.subr.mxu0 0.0
    %1700 = vmatpush1.msra.mxu0 %v1524
    %1701 = vmatprep.subr.mxu0 0.0
    %1702 = vmatpush1.msra.mxu0 %v1525
    %1703 = vmatprep.subr.mxu0 0.0
    %1704 = vmatpush1.msra.mxu0 %v1526
    %1705 = vmatprep.subr.mxu0 0.0
    %1706 = vmatpush1.msra.mxu0 %v1527
    %1707 = vmatprep.subr.mxu0 0.0
    %1708 = vmatpush1.msra.mxu0 0.0
    %1709 = vmatprep.subr.mxu0 0.0
    %1710 = vmatpush1.msra.mxu0 0.0
    %1711 = vmatprep.subr.mxu0 0.0
    %1712 = vmatpush1.msra.mxu0 0.0
    %1713 = vmatprep.subr.mxu0 0.0
    %1714 = vmatpush1.msra.mxu0 0.0
    %1715 = vmatprep.subr.mxu0 0.0
    %1716 = vmatpush1.msra.mxu0 0.0
    %1717 = vmatprep.subr.mxu0 0.0
    %1718 = vmatpush1.msra.mxu0 0.0
    %1719 = vmatprep.subr.mxu0 0.0
    %1720 = vmatpush1.msra.mxu0 0.0
    %1721 = vmatprep.subr.mxu0 0.0
    %1722 = vmatpush1.msra.mxu0 0.0
    %1723 = vmatprep.subr.mxu0 0.0
    %1724 = vmatpush1.msra.mxu0 0.0
    %1725 = vmatprep.subr.mxu0 0.0
    %1726 = vmatpush1.msra.mxu0 0.0
    %1727 = vmatprep.subr.mxu0 0.0
    %1728 = vmatpush1.msra.mxu0 0.0
    %1729 = vmatprep.subr.mxu0 0.0
    %1730 = vmatpush1.msra.mxu0 0.0
    %1731 = vmatprep.subr.mxu0 0.0
    %1732 = vmatpush1.msra.mxu0 0.0
    %1733 = vmatprep.subr.mxu0 0.0
    %1734 = vmatpush1.msra.mxu0 0.0
    %1735 = vmatprep.subr.mxu0 0.0
    %1736 = vmatpush1.msra.mxu0 0.0
    %1737 = vmatprep.subr.mxu0 0.0
    %1738 = vmatpush1.msra.mxu0 0.0
    %1739 = vmatprep.mubr.f32.mxu0 0.0
    %1740 = vmatmul.mubr.f32.gmra.mrb[0].mxu0 %v1568
    %v1741 = vpop.f32.mrb[0].mxu0
    %v1742 = vadd.f32 %v1643, %v1741
    %v1743 = vpop.f32.mrb[0].mxu0
    %1744 = vmatprep.mubr.f32.mxu0 0.0
    %1745 = vmatmul.mubr.f32.gmra.mrb[0].mxu0 %v1569
    %v1746 = vpop.f32.mrb[0].mxu0
    %v1747 = vpop.f32.mrb[0].mxu0
    %1748 = vmatprep.mubr.f32.mxu0 0.0
    %1749 = vmatmul.mubr.f32.gmra.mrb[0].mxu0 %v1570
    %v1750 = vpop.f32.mrb[0].mxu0
    %v1751 = vpop.f32.mrb[0].mxu0
    %1752 = vmatprep.mubr.f32.mxu0 0.0
    %1753 = vmatmul.mubr.f32.gmra.mrb[0].mxu0 %v1571
    %v1754 = vpop.f32.mrb[0].mxu0
    %v1755 = vpop.f32.mrb[0].mxu0
    %1756 = vmatprep.mubr.f32.mxu0 0.0
    %1757 = vmatmul.mubr.f32.gmra.mrb[0].mxu0 %v1572
    %v1758 = vpop.f32.mrb[0].mxu0
    %v1759 = vadd.f32 %v1660, %v1758
    %v1760 = vpop.f32.mrb[0].mxu0
    %1761 = vmatprep.mubr.f32.mxu0 0.0
    %1762 = vmatmul.mubr.f32.gmra.mrb[0].mxu0 %v1573
    %v1763 = vpop.f32.mrb[0].mxu0
    %v1764 = vpop.f32.mrb[0].mxu0
    %1765 = vmatprep.mubr.f32.mxu0 0.0
    %1766 = vmatmul.mubr.f32.gmra.mrb[0].mxu0 %v1574
    %v1767 = vpop.f32.mrb[0].mxu0
    %v1768 = vpop.f32.mrb[0].mxu0
    %1769 = vmatprep.mubr.f32.mxu0 0.0
    %1770 = vmatmul.mubr.f32.gmra.mrb[0].mxu0 %v1575
    %v1771 = vpop.f32.mrb[0].mxu0
    %v1772 = vpop.f32.mrb[0].mxu0
    %1773 = vdwg.mxu0
    %v1774 = vlaneseq
    %v1775 = vshrl.u32 %v1774, 7
    %v1776 = vsub.s32 4, %v1775
    %v1777 = vrot.slane %v132, %v1776
    %v1778 = vadd.f32 %v1742, %v1777
    %v1779 = vadd.f32 %v1759, %v1777
    %vm1780 = vcmp.gt.f32.partialorder %v1778, 0.0
    %vm1781 = vcmp.gt.f32.partialorder %v1779, 0.0
    %v1782 = vmul.f32 %v1778, 0.1
    %v1783 = vmul.f32 %v1779, 0.1
    %v1784 = vsel %vm1780, %v1778, %v1782
    %v1785 = vsel %vm1781, %v1779, %v1783
    %v1788 = vrot.slane %v1785, 7
    %vm1789 = vcmask 1041409
    %v1790 = vsel %vm1789, %v1788, %v1784
    %1792 = vst [vmem:[#allocation5] sm:$0x3] %v1790
    // Predicated region
    $region14: #{force_encoder_pallas.1} parent=1 // pred_check
      _
    $region15: #{force_encoder_pallas.1} parent=1 // pred_check_branch
      %1794 = sbr.rel (0) target = $region17
    $region16: #{force_encoder_pallas.1} parent=1 // pred_region
      %s1796 = ssub.s32 32, 32
      %1797 = vsyncadd [#allocation4], %s1796
      %s1799 = sshll.u32 [#allocation5], 4
      %s1800 = int_to_ptr.vmem [resolvable:$true] %s1799
      %1802 = dma.vmem_to_hbm [thread:$0]  %s1800, 32, %s2, [#allocation4]
    $region17: #{force_encoder_pallas.1} parent=1 // pred_fallthru
      _
    // Predicated region
    $region18: #{force_encoder_pallas.1} parent=1 // pred_check
      _
    $region19: #{force_encoder_pallas.1} parent=1 // pred_check_branch
      %1804 = sbr.rel (0) target = $region21
    $region20: #{force_encoder_pallas.1} parent=1 // pred_region
      %1805 = dma.done [#allocation4], 32
    $region21: #{force_encoder_pallas.1} parent=1 // pred_fallthru
      _
    %1806 = vsyncpa [#allocation3], 1
    %1807 = vsyncpa [#allocation4], 1

</llo_original>
